<compile_context>
chip_gen: v7x
topology: tpu7x:2x2x1
jax: 0.10.0
libtpu: 0.0.40
codegen_flags: <defaults>
</compile_context>

<pallas_src>
import functools

import jax
import jax.numpy as jnp
from jax import lax
from jax.experimental import pallas as pl
from jax.experimental.pallas import tpu as pltpu

_EPS = 1e-5


# -----------------------------------------------------------------------------
# Fused kernel builder (all sizes / flags are Python statics baked in)
# -----------------------------------------------------------------------------
def _make_fused_kernel(N, Cin, Ce, Cout, W, HW, stride, connect):

    def body(x_ref,    # (N, Cin, HW)      VMEM, lane-dense spatial
             w1_ref,   # (Ce, Cin)         VMEM (BN1 scale folded in)
             b1_ref,   # (Ce, 1)           VMEM (BN1 shift)
             a1_ref,   # (Ce, 1)           VMEM (PReLU1 alpha)
             wd_ref,   # (Ce, 9)           VMEM (BN2 scale folded in)
             b2_ref,   # (Ce, 1)           VMEM (BN2 shift)
             a2_ref,   # (Ce, 1)           VMEM (PReLU2 alpha)
             w3_ref,   # (Cout, Ce)        VMEM (BN3 scale folded in)
             b3_ref,   # (Cout, 1)         VMEM (BN3 shift)
             m_ref,    # (9, HW)           VMEM tap-validity masks (0/1 f32)
             sel_ref,  # (HW, HoWo) or None  VMEM stride-subsample selection
             o_ref):   # (N, Cout, HoWo)   VMEM output
        # Hoist every small parameter load once (Mosaic does not reliably CSE
        # identical ref loads across an unrolled trace).
        w1c = [w1_ref[:, c:c + 1] for c in range(Cin)]    # Cin x (Ce, 1)
        wdc = [wd_ref[:, k:k + 1] for k in range(9)]      # 9   x (Ce, 1)
        w3c = [w3_ref[:, e:e + 1] for e in range(Ce)]     # Ce  x (Cout, 1)
        b1, a1 = b1_ref[...], a1_ref[...]
        b2, a2 = b2_ref[...], a2_ref[...]
        b3 = b3_ref[...]
        msk = [m_ref[k:k + 1, :] for k in range(9)]       # 9 x (1, HW)
        sel = sel_ref[...] if sel_ref is not None else None

        for n in range(N):                       # batch folded into one step
            xt = x_ref[n]                        # (Cin, HW) lane-dense tile

            # ---- stage 1: 1x1 conv + BN + PReLU (dense (Ce, HW) tile) ----
            y1 = w1c[0] * xt[0:1, :]
            for c in range(1, Cin):
                y1 = y1 + w1c[c] * xt[c:c + 1, :]
            y1 = y1 + b1
            y1 = jnp.where(y1 >= 0.0, y1, a1 * y1)

            # ---- stage 2: 3x3 depthwise, computed dense (stride folded out).
            # Taps are lane rotations of the flattened plane (XLU) gated by
            # precomputed zero-padding masks; wrap-around lands exactly on the
            # masked (out-of-range) positions.
            acc2 = None
            for dh in (-1, 0, 1):
                for dw in (-1, 0, 1):
                    k = (dh + 1) * 3 + (dw + 1)
                    d = dh * W + dw
                    if d == 0:
                        t = y1
                    else:
                        t = pltpu.roll(y1, shift=(-d) % HW, axis=1) * msk[k]
                    contrib = wdc[k] * t
                    acc2 = contrib if acc2 is None else acc2 + contrib
            acc2 = acc2 + b2
            y2 = jnp.where(acc2 >= 0.0, acc2, a2 * acc2)

            # ---- stride > 1: subsample once via 0/1 selection matmul (MXU) ----
            if sel is not None:
                y2 = jnp.dot(y2, sel, preferred_element_type=jnp.float32)

            # ---- stage 3: 1x1 projection, accumulated into the VMEM output ----
            out0 = w3c[0] * y2[0:1, :] + b3
            if connect:
                out0 = out0 + xt                 # residual straight from input tile
            o_ref[n] = out0
            for e in range(1, Ce):
                o_ref[n] = o_ref[n] + w3c[e] * y2[e:e + 1, :]

    if stride == 1:
        def kernel(x_ref, w1_ref, b1_ref, a1_ref, wd_ref, b2_ref, a2_ref,
                   w3_ref, b3_ref, m_ref, o_ref):
            body(x_ref, w1_ref, b1_ref, a1_ref, wd_ref, b2_ref, a2_ref,
                 w3_ref, b3_ref, m_ref, None, o_ref)
        return kernel
    return body


# -----------------------------------------------------------------------------
# Bottleneck forward: one fused pallas_call, NCHW in / NCHW out
# -----------------------------------------------------------------------------
def _fold_bn(g, b, m, v):
    scale = g / jnp.sqrt(v + _EPS)
    shift = b - m * scale
    return scale, shift


def _full_spec(shape):
    zeros = (0,) * len(shape)
    return pl.BlockSpec(shape, lambda i: zeros)


@functools.partial(jax.jit, static_argnames=("stride", "connect"))
def bottleneck_forward(x_nchw, p, *, stride, connect):
    N, Cin, H, W = x_nchw.shape
    Ce = p["w1"].shape[0]
    Cout = p["w3"].shape[0]
    Ho = (H - 1) // stride + 1
    Wo = (W - 1) // stride + 1
    HW, HoWo = H * W, Ho * Wo
    if connect:
        assert stride == 1 and Cin == Cout, "residual needs stride==1 and inp==oup"

    f32 = jnp.float32
    # Free reshape (contiguous): spatial flattened into the lane dimension.
    x2 = x_nchw.astype(f32).reshape(N, Cin, HW)

    # Fold eval-mode BN into the conv weights (scale) and a per-channel shift.
    s1, sh1 = _fold_bn(p["g1"], p["b1"], p["m1"], p["v1"])
    s2, sh2 = _fold_bn(p["g2"], p["b2"], p["m2"], p["v2"])
    s3, sh3 = _fold_bn(p["g3"], p["b3"], p["m3"], p["v3"])

    w1f = (p["w1"][:, :, 0, 0] * s1[:, None]).astype(f32)                  # (Ce, Cin)
    wdf = (p["wd"][:, 0, :, :].reshape(Ce, 9) * s2[:, None]).astype(f32)   # (Ce, 9)
    w3f = (p["w3"][:, :, 0, 0] * s3[:, None]).astype(f32)                  # (Cout, Ce)
    b1c = sh1.reshape(Ce, 1).astype(f32)
    a1c = p["a1"].reshape(Ce, 1).astype(f32)
    b2c = sh2.reshape(Ce, 1).astype(f32)
    a2c = p["a2"].reshape(Ce, 1).astype(f32)
    b3c = sh3.reshape(Cout, 1).astype(f32)

    # Destination-indexed validity masks for the 9 depthwise taps (zero pad).
    hh = jnp.arange(H)
    ww = jnp.arange(W)
    mask_rows = []
    for dh in (-1, 0, 1):
        rok = (hh + dh >= 0) & (hh + dh < H)
        for dw in (-1, 0, 1):
            cok = (ww + dw >= 0) & (ww + dw < W)
            mask_rows.append((rok[:, None] & cok[None, :]).reshape(HW))
    masks = jnp.stack(mask_rows, axis=0).astype(f32)                        # (9, HW)

    args = [x2, w1f, b1c, a1c, wdf, b2c, a2c, w3f, b3c, masks]
    if stride > 1:
        # 0/1 selection matrix: dense (H*W) -> strided (Ho*Wo) subsample.
        q = jnp.arange(HoWo)
        src = (q // Wo) * (stride * W) + (q % Wo) * stride
        sel = (jnp.arange(HW)[:, None] == src[None, :]).astype(f32)         # (HW, HoWo)
        args.append(sel)

    kernel = _make_fused_kernel(N, Cin, Ce, Cout, W, HW, stride, connect)

    out = pl.pallas_call(
        kernel,
        out_shape=jax.ShapeDtypeStruct((N, Cout, HoWo), f32),
        grid=(1,),   # whole (tiny) batch in one step: amortizes per-step overhead
        in_specs=[_full_spec(a.shape) for a in args],
        out_specs=_full_spec((N, Cout, HoWo)),
        compiler_params=pltpu.CompilerParams(dimension_semantics=("arbitrary",)),
    )(*args)
    return out.reshape(N, Cout, Ho, Wo)


# -----------------------------------------------------------------------------
# Pure-JAX (lax.conv) reference mirroring the PyTorch module in eval mode
# -----------------------------------------------------------------------------
def reference_forward(x, p, *, stride, connect):
    dn = ("NCHW", "OIHW", "NCHW")

    def bn(y, g, b, m, v):
        return ((y - m[None, :, None, None]) /
                jnp.sqrt(v + _EPS)[None, :, None, None] *
                g[None, :, None, None] + b[None, :, None, None])

    def prelu(y, a):
        return jnp.where(y >= 0, y, a[None, :, None, None] * y)

    y = lax.conv_general_dilated(x, p["w1"], (1, 1), "VALID", dimension_numbers=dn)
    y = prelu(bn(y, p["g1"], p["b1"], p["m1"], p["v1"]), p["a1"])
    y = lax.conv_general_dilated(y, p["wd"], (stride, stride), ((1, 1), (1, 1)),
                                 dimension_numbers=dn,
                                 feature_group_count=p["wd"].shape[0])
    y = prelu(bn(y, p["g2"], p["b2"], p["m2"], p["v2"]), p["a2"])
    y = lax.conv_general_dilated(y, p["w3"], (1, 1), "VALID", dimension_numbers=dn)
    y = bn(y, p["g3"], p["b3"], p["m3"], p["v3"])
    return x + y if connect else y


def make_params(key, inp, oup, expansion):
    ce = inp * expansion
    ks = jax.random.split(key, 12)
    f32 = jnp.float32
    return {
        "w1": jax.random.normal(ks[0], (ce, inp, 1, 1), f32) * 0.3,
        "g1": 1.0 + 0.1 * jax.random.normal(ks[1], (ce,), f32),
        "b1": 0.1 * jax.random.normal(ks[2], (ce,), f32),
        "m1": 0.05 * jax.random.normal(ks[3], (ce,), f32),
        "v1": 0.9 + 0.2 * jax.random.uniform(ks[3], (ce,), f32),
        "a1": jnp.full((ce,), 0.25, f32),
        "wd": jax.random.normal(ks[4], (ce, 1, 3, 3), f32) * 0.3,
        "g2": 1.0 + 0.1 * jax.random.normal(ks[5], (ce,), f32),
        "b2": 0.1 * jax.random.normal(ks[6], (ce,), f32),
        "m2": 0.05 * jax.random.normal(ks[7], (ce,), f32),
        "v2": 0.9 + 0.2 * jax.random.uniform(ks[7], (ce,), f32),
        "a2": jnp.full((ce,), 0.25, f32),
        "w3": jax.random.normal(ks[8], (oup, ce, 1, 1), f32) * 0.3,
        "g3": 1.0 + 0.1 * jax.random.normal(ks[9], (oup,), f32),
        "b3": 0.1 * jax.random.normal(ks[10], (oup,), f32),
        "m3": 0.05 * jax.random.normal(ks[11], (oup,), f32),
        "v3": 0.9 + 0.2 * jax.random.uniform(ks[11], (oup,), f32),
    }


def _run_case(key, *, inp, oup, stride, expansion, H=16, W=16, N=2):
    connect = (stride == 1 and inp == oup)
    kx, kp = jax.random.split(key)
    x = jax.random.normal(kx, (N, inp, H, W), jnp.float32)   # NCHW like PyTorch
    params = make_params(kp, inp, oup, expansion)

    out = bottleneck_forward(x, params, stride=stride, connect=connect)
    out = jax.block_until_ready(out)

    ref = reference_forward(x, params, stride=stride, connect=connect)
    assert out.shape == ref.shape, (out.shape, ref.shape)
    err = float(jnp.max(jnp.abs(out - ref)))
    assert jnp.allclose(out, ref, rtol=1e-4, atol=1e-4), err
    return out


if __name__ == "__main__":
    key = jax.random.PRNGKey(0)
    k1, k2 = jax.random.split(key)

    # Case A: Bottleneck(inp=4, oup=4, stride=1, expansion=2) -> residual path
    _run_case(k1, inp=4, oup=4, stride=2 - 1, expansion=2)

    # Case B: Bottleneck(inp=4, oup=8, stride=2, expansion=2) -> strided path
    # (exercises the dense-compute + selection-matmul subsample).
    _run_case(k2, inp=4, oup=8, stride=2, expansion=2)

    print("KERNEL_OK")
</pallas_src>

<mosaic_0001>
module attributes {stable_mosaic.version = 11 : i64} {
  func.func @kernel(%arg0: i32, %arg1: memref<2x4x256xf32, #tpu.memory_space<vmem>>, %arg2: memref<8x4xf32, #tpu.memory_space<vmem>>, %arg3: memref<8x1xf32, #tpu.memory_space<vmem>>, %arg4: memref<8x1xf32, #tpu.memory_space<vmem>>, %arg5: memref<8x9xf32, #tpu.memory_space<vmem>>, %arg6: memref<8x1xf32, #tpu.memory_space<vmem>>, %arg7: memref<8x1xf32, #tpu.memory_space<vmem>>, %arg8: memref<4x8xf32, #tpu.memory_space<vmem>>, %arg9: memref<4x1xf32, #tpu.memory_space<vmem>>, %arg10: memref<9x256xf32, #tpu.memory_space<vmem>>, %arg11: memref<2x4x256xf32, #tpu.memory_space<vmem>>) attributes {dimension_semantics = [#tpu.dimension_semantics<arbitrary>], iteration_bounds = array<i64: 1>, scalar_prefetch = 0 : i64, scratch_operands = 0 : i64, tpu.core_type = #tpu.core_type<tc>, window_params = [{pipeline_mode = #tpu.pipeline_mode<synchronous>, transform_indices = @transform_0, window_bounds = array<i64: 2, 4, 256>}, {pipeline_mode = #tpu.pipeline_mode<synchronous>, transform_indices = @transform_1, window_bounds = array<i64: 8, 4>}, {pipeline_mode = #tpu.pipeline_mode<synchronous>, transform_indices = @transform_2, window_bounds = array<i64: 8, 1>}, {pipeline_mode = #tpu.pipeline_mode<synchronous>, transform_indices = @transform_3, window_bounds = array<i64: 8, 1>}, {pipeline_mode = #tpu.pipeline_mode<synchronous>, transform_indices = @transform_4, window_bounds = array<i64: 8, 9>}, {pipeline_mode = #tpu.pipeline_mode<synchronous>, transform_indices = @transform_5, window_bounds = array<i64: 8, 1>}, {pipeline_mode = #tpu.pipeline_mode<synchronous>, transform_indices = @transform_6, window_bounds = array<i64: 8, 1>}, {pipeline_mode = #tpu.pipeline_mode<synchronous>, transform_indices = @transform_7, window_bounds = array<i64: 4, 8>}, {pipeline_mode = #tpu.pipeline_mode<synchronous>, transform_indices = @transform_8, window_bounds = array<i64: 4, 1>}, {pipeline_mode = #tpu.pipeline_mode<synchronous>, transform_indices = @transform_9, window_bounds = array<i64: 9, 256>}, {pipeline_mode = #tpu.pipeline_mode<synchronous>, transform_indices = @transform_10, window_bounds = array<i64: 2, 4, 256>}]} {
    %c0 = arith.constant 0 : index
    %c0_0 = arith.constant 0 : index
    %0 = vector.load %arg2[%c0, %c0_0] : memref<8x4xf32, #tpu.memory_space<vmem>>, vector<8x1xf32>
    %c0_1 = arith.constant 0 : index
    %c1 = arith.constant 1 : index
    %1 = vector.load %arg2[%c0_1, %c1] : memref<8x4xf32, #tpu.memory_space<vmem>>, vector<8x1xf32>
    %c0_2 = arith.constant 0 : index
    %c2 = arith.constant 2 : index
    %2 = vector.load %arg2[%c0_2, %c2] : memref<8x4xf32, #tpu.memory_space<vmem>>, vector<8x1xf32>
    %c0_3 = arith.constant 0 : index
    %c3 = arith.constant 3 : index
    %3 = vector.load %arg2[%c0_3, %c3] : memref<8x4xf32, #tpu.memory_space<vmem>>, vector<8x1xf32>
    %c0_4 = arith.constant 0 : index
    %c0_5 = arith.constant 0 : index
    %4 = vector.load %arg5[%c0_4, %c0_5] : memref<8x9xf32, #tpu.memory_space<vmem>>, vector<8x1xf32>
    %c0_6 = arith.constant 0 : index
    %c1_7 = arith.constant 1 : index
    %5 = vector.load %arg5[%c0_6, %c1_7] : memref<8x9xf32, #tpu.memory_space<vmem>>, vector<8x1xf32>
    %c0_8 = arith.constant 0 : index
    %c2_9 = arith.constant 2 : index
    %6 = vector.load %arg5[%c0_8, %c2_9] : memref<8x9xf32, #tpu.memory_space<vmem>>, vector<8x1xf32>
    %c0_10 = arith.constant 0 : index
    %c3_11 = arith.constant 3 : index
    %7 = vector.load %arg5[%c0_10, %c3_11] : memref<8x9xf32, #tpu.memory_space<vmem>>, vector<8x1xf32>
    %c0_12 = arith.constant 0 : index
    %c4 = arith.constant 4 : index
    %8 = vector.load %arg5[%c0_12, %c4] : memref<8x9xf32, #tpu.memory_space<vmem>>, vector<8x1xf32>
    %c0_13 = arith.constant 0 : index
    %c5 = arith.constant 5 : index
    %9 = vector.load %arg5[%c0_13, %c5] : memref<8x9xf32, #tpu.memory_space<vmem>>, vector<8x1xf32>
    %c0_14 = arith.constant 0 : index
    %c6 = arith.constant 6 : index
    %10 = vector.load %arg5[%c0_14, %c6] : memref<8x9xf32, #tpu.memory_space<vmem>>, vector<8x1xf32>
    %c0_15 = arith.constant 0 : index
    %c7 = arith.constant 7 : index
    %11 = vector.load %arg5[%c0_15, %c7] : memref<8x9xf32, #tpu.memory_space<vmem>>, vector<8x1xf32>
    %c0_16 = arith.constant 0 : index
    %c8 = arith.constant 8 : index
    %12 = vector.load %arg5[%c0_16, %c8] : memref<8x9xf32, #tpu.memory_space<vmem>>, vector<8x1xf32>
    %c0_17 = arith.constant 0 : index
    %c0_18 = arith.constant 0 : index
    %13 = vector.load %arg8[%c0_17, %c0_18] : memref<4x8xf32, #tpu.memory_space<vmem>>, vector<4x1xf32>
    %c0_19 = arith.constant 0 : index
    %c1_20 = arith.constant 1 : index
    %14 = vector.load %arg8[%c0_19, %c1_20] : memref<4x8xf32, #tpu.memory_space<vmem>>, vector<4x1xf32>
    %c0_21 = arith.constant 0 : index
    %c2_22 = arith.constant 2 : index
    %15 = vector.load %arg8[%c0_21, %c2_22] : memref<4x8xf32, #tpu.memory_space<vmem>>, vector<4x1xf32>
    %c0_23 = arith.constant 0 : index
    %c3_24 = arith.constant 3 : index
    %16 = vector.load %arg8[%c0_23, %c3_24] : memref<4x8xf32, #tpu.memory_space<vmem>>, vector<4x1xf32>
    %c0_25 = arith.constant 0 : index
    %c4_26 = arith.constant 4 : index
    %17 = vector.load %arg8[%c0_25, %c4_26] : memref<4x8xf32, #tpu.memory_space<vmem>>, vector<4x1xf32>
    %c0_27 = arith.constant 0 : index
    %c5_28 = arith.constant 5 : index
    %18 = vector.load %arg8[%c0_27, %c5_28] : memref<4x8xf32, #tpu.memory_space<vmem>>, vector<4x1xf32>
    %c0_29 = arith.constant 0 : index
    %c6_30 = arith.constant 6 : index
    %19 = vector.load %arg8[%c0_29, %c6_30] : memref<4x8xf32, #tpu.memory_space<vmem>>, vector<4x1xf32>
    %c0_31 = arith.constant 0 : index
    %c7_32 = arith.constant 7 : index
    %20 = vector.load %arg8[%c0_31, %c7_32] : memref<4x8xf32, #tpu.memory_space<vmem>>, vector<4x1xf32>
    %c0_33 = arith.constant 0 : index
    %c0_34 = arith.constant 0 : index
    %21 = vector.load %arg3[%c0_33, %c0_34] : memref<8x1xf32, #tpu.memory_space<vmem>>, vector<8x1xf32>
    %c0_35 = arith.constant 0 : index
    %c0_36 = arith.constant 0 : index
    %22 = vector.load %arg4[%c0_35, %c0_36] : memref<8x1xf32, #tpu.memory_space<vmem>>, vector<8x1xf32>
    %c0_37 = arith.constant 0 : index
    %c0_38 = arith.constant 0 : index
    %23 = vector.load %arg6[%c0_37, %c0_38] : memref<8x1xf32, #tpu.memory_space<vmem>>, vector<8x1xf32>
    %c0_39 = arith.constant 0 : index
    %c0_40 = arith.constant 0 : index
    %24 = vector.load %arg7[%c0_39, %c0_40] : memref<8x1xf32, #tpu.memory_space<vmem>>, vector<8x1xf32>
    %c0_41 = arith.constant 0 : index
    %c0_42 = arith.constant 0 : index
    %25 = vector.load %arg9[%c0_41, %c0_42] : memref<4x1xf32, #tpu.memory_space<vmem>>, vector<4x1xf32>
    %c0_43 = arith.constant 0 : index
    %c0_44 = arith.constant 0 : index
    %26 = vector.load %arg10[%c0_43, %c0_44] : memref<9x256xf32, #tpu.memory_space<vmem>>, vector<1x256xf32>
    %c1_45 = arith.constant 1 : index
    %c0_46 = arith.constant 0 : index
    %27 = vector.load %arg10[%c1_45, %c0_46] : memref<9x256xf32, #tpu.memory_space<vmem>>, vector<1x256xf32>
    %c2_47 = arith.constant 2 : index
    %c0_48 = arith.constant 0 : index
    %28 = vector.load %arg10[%c2_47, %c0_48] : memref<9x256xf32, #tpu.memory_space<vmem>>, vector<1x256xf32>
    %c3_49 = arith.constant 3 : index
    %c0_50 = arith.constant 0 : index
    %29 = vector.load %arg10[%c3_49, %c0_50] : memref<9x256xf32, #tpu.memory_space<vmem>>, vector<1x256xf32>
    %c5_51 = arith.constant 5 : index
    %c0_52 = arith.constant 0 : index
    %30 = vector.load %arg10[%c5_51, %c0_52] : memref<9x256xf32, #tpu.memory_space<vmem>>, vector<1x256xf32>
    %c6_53 = arith.constant 6 : index
    %c0_54 = arith.constant 0 : index
    %31 = vector.load %arg10[%c6_53, %c0_54] : memref<9x256xf32, #tpu.memory_space<vmem>>, vector<1x256xf32>
    %c7_55 = arith.constant 7 : index
    %c0_56 = arith.constant 0 : index
    %32 = vector.load %arg10[%c7_55, %c0_56] : memref<9x256xf32, #tpu.memory_space<vmem>>, vector<1x256xf32>
    %c8_57 = arith.constant 8 : index
    %c0_58 = arith.constant 0 : index
    %33 = vector.load %arg10[%c8_57, %c0_58] : memref<9x256xf32, #tpu.memory_space<vmem>>, vector<1x256xf32>
    %c0_59 = arith.constant 0 : index
    %c0_60 = arith.constant 0 : index
    %c0_61 = arith.constant 0 : index
    %34 = vector.load %arg1[%c0_59, %c0_60, %c0_61] : memref<2x4x256xf32, #tpu.memory_space<vmem>>, vector<1x4x256xf32>
    %35 = vector.shape_cast %34 : vector<1x4x256xf32> to vector<4x256xf32>
    %36 = vector.extract_strided_slice %35 {offsets = [0, 0], sizes = [1, 256], strides = [1, 1]} : vector<4x256xf32> to vector<1x256xf32>
    %37 = vector.broadcast %0 : vector<8x1xf32> to vector<8x256xf32>
    %38 = vector.broadcast %36 : vector<1x256xf32> to vector<8x256xf32>
    %39 = arith.mulf %37, %38 : vector<8x256xf32>
    %40 = vector.extract_strided_slice %35 {offsets = [1, 0], sizes = [1, 256], strides = [1, 1]} : vector<4x256xf32> to vector<1x256xf32>
    %41 = vector.broadcast %1 : vector<8x1xf32> to vector<8x256xf32>
    %42 = vector.broadcast %40 : vector<1x256xf32> to vector<8x256xf32>
    %43 = arith.mulf %41, %42 : vector<8x256xf32>
    %44 = arith.addf %39, %43 : vector<8x256xf32>
    %45 = vector.extract_strided_slice %35 {offsets = [2, 0], sizes = [1, 256], strides = [1, 1]} : vector<4x256xf32> to vector<1x256xf32>
    %46 = vector.broadcast %2 : vector<8x1xf32> to vector<8x256xf32>
    %47 = vector.broadcast %45 : vector<1x256xf32> to vector<8x256xf32>
    %48 = arith.mulf %46, %47 : vector<8x256xf32>
    %49 = arith.addf %44, %48 : vector<8x256xf32>
    %50 = vector.extract_strided_slice %35 {offsets = [3, 0], sizes = [1, 256], strides = [1, 1]} : vector<4x256xf32> to vector<1x256xf32>
    %51 = vector.broadcast %3 : vector<8x1xf32> to vector<8x256xf32>
    %52 = vector.broadcast %50 : vector<1x256xf32> to vector<8x256xf32>
    %53 = arith.mulf %51, %52 : vector<8x256xf32>
    %54 = arith.addf %49, %53 : vector<8x256xf32>
    %55 = vector.broadcast %21 : vector<8x1xf32> to vector<8x256xf32>
    %56 = arith.addf %54, %55 : vector<8x256xf32>
    %cst = arith.constant 0.000000e+00 : f32
    %57 = vector.broadcast %cst : f32 to vector<8x256xf32>
    %58 = arith.cmpf oge, %56, %57 : vector<8x256xf32>
    %59 = vector.broadcast %22 : vector<8x1xf32> to vector<8x256xf32>
    %60 = arith.mulf %59, %56 : vector<8x256xf32>
    %61 = arith.select %58, %56, %60 : vector<8x256xi1>, vector<8x256xf32>
    %c17_i32 = arith.constant 17 : i32
    %62 = tpu.dynamic_rotate %61 by %c17_i32 dim 1 : vector<8x256xf32>, i32 -> vector<8x256xf32>
    %63 = vector.broadcast %26 : vector<1x256xf32> to vector<8x256xf32>
    %64 = arith.mulf %62, %63 : vector<8x256xf32>
    %65 = vector.broadcast %4 : vector<8x1xf32> to vector<8x256xf32>
    %66 = arith.mulf %65, %64 : vector<8x256xf32>
    %c16_i32 = arith.constant 16 : i32
    %67 = tpu.dynamic_rotate %61 by %c16_i32 dim 1 : vector<8x256xf32>, i32 -> vector<8x256xf32>
    %68 = vector.broadcast %27 : vector<1x256xf32> to vector<8x256xf32>
    %69 = arith.mulf %67, %68 : vector<8x256xf32>
    %70 = vector.broadcast %5 : vector<8x1xf32> to vector<8x256xf32>
    %71 = arith.mulf %70, %69 : vector<8x256xf32>
    %72 = arith.addf %66, %71 : vector<8x256xf32>
    %c15_i32 = arith.constant 15 : i32
    %73 = tpu.dynamic_rotate %61 by %c15_i32 dim 1 : vector<8x256xf32>, i32 -> vector<8x256xf32>
    %74 = vector.broadcast %28 : vector<1x256xf32> to vector<8x256xf32>
    %75 = arith.mulf %73, %74 : vector<8x256xf32>
    %76 = vector.broadcast %6 : vector<8x1xf32> to vector<8x256xf32>
    %77 = arith.mulf %76, %75 : vector<8x256xf32>
    %78 = arith.addf %72, %77 : vector<8x256xf32>
    %c1_i32 = arith.constant 1 : i32
    %79 = tpu.dynamic_rotate %61 by %c1_i32 dim 1 : vector<8x256xf32>, i32 -> vector<8x256xf32>
    %80 = vector.broadcast %29 : vector<1x256xf32> to vector<8x256xf32>
    %81 = arith.mulf %79, %80 : vector<8x256xf32>
    %82 = vector.broadcast %7 : vector<8x1xf32> to vector<8x256xf32>
    %83 = arith.mulf %82, %81 : vector<8x256xf32>
    %84 = arith.addf %78, %83 : vector<8x256xf32>
    %85 = vector.broadcast %8 : vector<8x1xf32> to vector<8x256xf32>
    %86 = arith.mulf %85, %61 : vector<8x256xf32>
    %87 = arith.addf %84, %86 : vector<8x256xf32>
    %c255_i32 = arith.constant 255 : i32
    %88 = tpu.dynamic_rotate %61 by %c255_i32 dim 1 : vector<8x256xf32>, i32 -> vector<8x256xf32>
    %89 = vector.broadcast %30 : vector<1x256xf32> to vector<8x256xf32>
    %90 = arith.mulf %88, %89 : vector<8x256xf32>
    %91 = vector.broadcast %9 : vector<8x1xf32> to vector<8x256xf32>
    %92 = arith.mulf %91, %90 : vector<8x256xf32>
    %93 = arith.addf %87, %92 : vector<8x256xf32>
    %c241_i32 = arith.constant 241 : i32
    %94 = tpu.dynamic_rotate %61 by %c241_i32 dim 1 : vector<8x256xf32>, i32 -> vector<8x256xf32>
    %95 = vector.broadcast %31 : vector<1x256xf32> to vector<8x256xf32>
    %96 = arith.mulf %94, %95 : vector<8x256xf32>
    %97 = vector.broadcast %10 : vector<8x1xf32> to vector<8x256xf32>
    %98 = arith.mulf %97, %96 : vector<8x256xf32>
    %99 = arith.addf %93, %98 : vector<8x256xf32>
    %c240_i32 = arith.constant 240 : i32
    %100 = tpu.dynamic_rotate %61 by %c240_i32 dim 1 : vector<8x256xf32>, i32 -> vector<8x256xf32>
    %101 = vector.broadcast %32 : vector<1x256xf32> to vector<8x256xf32>
    %102 = arith.mulf %100, %101 : vector<8x256xf32>
    %103 = vector.broadcast %11 : vector<8x1xf32> to vector<8x256xf32>
    %104 = arith.mulf %103, %102 : vector<8x256xf32>
    %105 = arith.addf %99, %104 : vector<8x256xf32>
    %c239_i32 = arith.constant 239 : i32
    %106 = tpu.dynamic_rotate %61 by %c239_i32 dim 1 : vector<8x256xf32>, i32 -> vector<8x256xf32>
    %107 = vector.broadcast %33 : vector<1x256xf32> to vector<8x256xf32>
    %108 = arith.mulf %106, %107 : vector<8x256xf32>
    %109 = vector.broadcast %12 : vector<8x1xf32> to vector<8x256xf32>
    %110 = arith.mulf %109, %108 : vector<8x256xf32>
    %111 = arith.addf %105, %110 : vector<8x256xf32>
    %112 = vector.broadcast %23 : vector<8x1xf32> to vector<8x256xf32>
    %113 = arith.addf %111, %112 : vector<8x256xf32>
    %cst_62 = arith.constant 0.000000e+00 : f32
    %114 = vector.broadcast %cst_62 : f32 to vector<8x256xf32>
    %115 = arith.cmpf oge, %113, %114 : vector<8x256xf32>
    %116 = vector.broadcast %24 : vector<8x1xf32> to vector<8x256xf32>
    %117 = arith.mulf %116, %113 : vector<8x256xf32>
    %118 = arith.select %115, %113, %117 : vector<8x256xi1>, vector<8x256xf32>
    %119 = vector.extract_strided_slice %118 {offsets = [0, 0], sizes = [1, 256], strides = [1, 1]} : vector<8x256xf32> to vector<1x256xf32>
    %120 = vector.broadcast %13 : vector<4x1xf32> to vector<4x256xf32>
    %121 = vector.broadcast %119 : vector<1x256xf32> to vector<4x256xf32>
    %122 = arith.mulf %120, %121 : vector<4x256xf32>
    %123 = vector.broadcast %25 : vector<4x1xf32> to vector<4x256xf32>
    %124 = arith.addf %122, %123 : vector<4x256xf32>
    %125 = arith.addf %124, %35 : vector<4x256xf32>
    %c0_63 = arith.constant 0 : index
    %c0_64 = arith.constant 0 : index
    %c0_65 = arith.constant 0 : index
    %126 = vector.load %arg11[%c0_63, %c0_64, %c0_65] : memref<2x4x256xf32, #tpu.memory_space<vmem>>, vector<1x4x256xf32>
    %127 = vector.shape_cast %126 : vector<1x4x256xf32> to vector<4x256xf32>
    %128 = vector.shape_cast %125 : vector<4x256xf32> to vector<1x4x256xf32>
    tpu.vector_store %arg11[%c0_63, %c0_64, %c0_65], %128 {strides = array<i32>} : memref<2x4x256xf32, #tpu.memory_space<vmem>>, vector<1x4x256xf32>,
    %c0_66 = arith.constant 0 : index
    %c0_67 = arith.constant 0 : index
    %c0_68 = arith.constant 0 : index
    %129 = vector.load %arg11[%c0_66, %c0_67, %c0_68] : memref<2x4x256xf32, #tpu.memory_space<vmem>>, vector<1x4x256xf32>
    %130 = vector.shape_cast %129 : vector<1x4x256xf32> to vector<4x256xf32>
    %131 = vector.extract_strided_slice %118 {offsets = [1, 0], sizes = [1, 256], strides = [1, 1]} : vector<8x256xf32> to vector<1x256xf32>
    %132 = vector.broadcast %14 : vector<4x1xf32> to vector<4x256xf32>
    %133 = vector.broadcast %131 : vector<1x256xf32> to vector<4x256xf32>
    %134 = arith.mulf %132, %133 : vector<4x256xf32>
    %135 = arith.addf %130, %134 : vector<4x256xf32>
    %c0_69 = arith.constant 0 : index
    %c0_70 = arith.constant 0 : index
    %c0_71 = arith.constant 0 : index
    %136 = vector.load %arg11[%c0_69, %c0_70, %c0_71] : memref<2x4x256xf32, #tpu.memory_space<vmem>>, vector<1x4x256xf32>
    %137 = vector.shape_cast %136 : vector<1x4x256xf32> to vector<4x256xf32>
    %138 = vector.shape_cast %135 : vector<4x256xf32> to vector<1x4x256xf32>
    tpu.vector_store %arg11[%c0_69, %c0_70, %c0_71], %138 {strides = array<i32>} : memref<2x4x256xf32, #tpu.memory_space<vmem>>, vector<1x4x256xf32>,
    %c0_72 = arith.constant 0 : index
    %c0_73 = arith.constant 0 : index
    %c0_74 = arith.constant 0 : index
    %139 = vector.load %arg11[%c0_72, %c0_73, %c0_74] : memref<2x4x256xf32, #tpu.memory_space<vmem>>, vector<1x4x256xf32>
    %140 = vector.shape_cast %139 : vector<1x4x256xf32> to vector<4x256xf32>
    %141 = vector.extract_strided_slice %118 {offsets = [2, 0], sizes = [1, 256], strides = [1, 1]} : vector<8x256xf32> to vector<1x256xf32>
    %142 = vector.broadcast %15 : vector<4x1xf32> to vector<4x256xf32>
    %143 = vector.broadcast %141 : vector<1x256xf32> to vector<4x256xf32>
    %144 = arith.mulf %142, %143 : vector<4x256xf32>
    %145 = arith.addf %140, %144 : vector<4x256xf32>
    %c0_75 = arith.constant 0 : index
    %c0_76 = arith.constant 0 : index
    %c0_77 = arith.constant 0 : index
    %146 = vector.load %arg11[%c0_75, %c0_76, %c0_77] : memref<2x4x256xf32, #tpu.memory_space<vmem>>, vector<1x4x256xf32>
    %147 = vector.shape_cast %146 : vector<1x4x256xf32> to vector<4x256xf32>
    %148 = vector.shape_cast %145 : vector<4x256xf32> to vector<1x4x256xf32>
    tpu.vector_store %arg11[%c0_75, %c0_76, %c0_77], %148 {strides = array<i32>} : memref<2x4x256xf32, #tpu.memory_space<vmem>>, vector<1x4x256xf32>,
    %c0_78 = arith.constant 0 : index
    %c0_79 = arith.constant 0 : index
    %c0_80 = arith.constant 0 : index
    %149 = vector.load %arg11[%c0_78, %c0_79, %c0_80] : memref<2x4x256xf32, #tpu.memory_space<vmem>>, vector<1x4x256xf32>
    %150 = vector.shape_cast %149 : vector<1x4x256xf32> to vector<4x256xf32>
    %151 = vector.extract_strided_slice %118 {offsets = [3, 0], sizes = [1, 256], strides = [1, 1]} : vector<8x256xf32> to vector<1x256xf32>
    %152 = vector.broadcast %16 : vector<4x1xf32> to vector<4x256xf32>
    %153 = vector.broadcast %151 : vector<1x256xf32> to vector<4x256xf32>
    %154 = arith.mulf %152, %153 : vector<4x256xf32>
    %155 = arith.addf %150, %154 : vector<4x256xf32>
    %c0_81 = arith.constant 0 : index
    %c0_82 = arith.constant 0 : index
    %c0_83 = arith.constant 0 : index
    %156 = vector.load %arg11[%c0_81, %c0_82, %c0_83] : memref<2x4x256xf32, #tpu.memory_space<vmem>>, vector<1x4x256xf32>
    %157 = vector.shape_cast %156 : vector<1x4x256xf32> to vector<4x256xf32>
    %158 = vector.shape_cast %155 : vector<4x256xf32> to vector<1x4x256xf32>
    tpu.vector_store %arg11[%c0_81, %c0_82, %c0_83], %158 {strides = array<i32>} : memref<2x4x256xf32, #tpu.memory_space<vmem>>, vector<1x4x256xf32>,
    %c0_84 = arith.constant 0 : index
    %c0_85 = arith.constant 0 : index
    %c0_86 = arith.constant 0 : index
    %159 = vector.load %arg11[%c0_84, %c0_85, %c0_86] : memref<2x4x256xf32, #tpu.memory_space<vmem>>, vector<1x4x256xf32>
    %160 = vector.shape_cast %159 : vector<1x4x256xf32> to vector<4x256xf32>
    %161 = vector.extract_strided_slice %118 {offsets = [4, 0], sizes = [1, 256], strides = [1, 1]} : vector<8x256xf32> to vector<1x256xf32>
    %162 = vector.broadcast %17 : vector<4x1xf32> to vector<4x256xf32>
    %163 = vector.broadcast %161 : vector<1x256xf32> to vector<4x256xf32>
    %164 = arith.mulf %162, %163 : vector<4x256xf32>
    %165 = arith.addf %160, %164 : vector<4x256xf32>
    %c0_87 = arith.constant 0 : index
    %c0_88 = arith.constant 0 : index
    %c0_89 = arith.constant 0 : index
    %166 = vector.load %arg11[%c0_87, %c0_88, %c0_89] : memref<2x4x256xf32, #tpu.memory_space<vmem>>, vector<1x4x256xf32>
    %167 = vector.shape_cast %166 : vector<1x4x256xf32> to vector<4x256xf32>
    %168 = vector.shape_cast %165 : vector<4x256xf32> to vector<1x4x256xf32>
    tpu.vector_store %arg11[%c0_87, %c0_88, %c0_89], %168 {strides = array<i32>} : memref<2x4x256xf32, #tpu.memory_space<vmem>>, vector<1x4x256xf32>,
    %c0_90 = arith.constant 0 : index
    %c0_91 = arith.constant 0 : index
    %c0_92 = arith.constant 0 : index
    %169 = vector.load %arg11[%c0_90, %c0_91, %c0_92] : memref<2x4x256xf32, #tpu.memory_space<vmem>>, vector<1x4x256xf32>
    %170 = vector.shape_cast %169 : vector<1x4x256xf32> to vector<4x256xf32>
    %171 = vector.extract_strided_slice %118 {offsets = [5, 0], sizes = [1, 256], strides = [1, 1]} : vector<8x256xf32> to vector<1x256xf32>
    %172 = vector.broadcast %18 : vector<4x1xf32> to vector<4x256xf32>
    %173 = vector.broadcast %171 : vector<1x256xf32> to vector<4x256xf32>
    %174 = arith.mulf %172, %173 : vector<4x256xf32>
    %175 = arith.addf %170, %174 : vector<4x256xf32>
    %c0_93 = arith.constant 0 : index
    %c0_94 = arith.constant 0 : index
    %c0_95 = arith.constant 0 : index
    %176 = vector.load %arg11[%c0_93, %c0_94, %c0_95] : memref<2x4x256xf32, #tpu.memory_space<vmem>>, vector<1x4x256xf32>
    %177 = vector.shape_cast %176 : vector<1x4x256xf32> to vector<4x256xf32>
    %178 = vector.shape_cast %175 : vector<4x256xf32> to vector<1x4x256xf32>
    tpu.vector_store %arg11[%c0_93, %c0_94, %c0_95], %178 {strides = array<i32>} : memref<2x4x256xf32, #tpu.memory_space<vmem>>, vector<1x4x256xf32>,
    %c0_96 = arith.constant 0 : index
    %c0_97 = arith.constant 0 : index
    %c0_98 = arith.constant 0 : index
    %179 = vector.load %arg11[%c0_96, %c0_97, %c0_98] : memref<2x4x256xf32, #tpu.memory_space<vmem>>, vector<1x4x256xf32>
    %180 = vector.shape_cast %179 : vector<1x4x256xf32> to vector<4x256xf32>
    %181 = vector.extract_strided_slice %118 {offsets = [6, 0], sizes = [1, 256], strides = [1, 1]} : vector<8x256xf32> to vector<1x256xf32>
    %182 = vector.broadcast %19 : vector<4x1xf32> to vector<4x256xf32>
    %183 = vector.broadcast %181 : vector<1x256xf32> to vector<4x256xf32>
    %184 = arith.mulf %182, %183 : vector<4x256xf32>
    %185 = arith.addf %180, %184 : vector<4x256xf32>
    %c0_99 = arith.constant 0 : index
    %c0_100 = arith.constant 0 : index
    %c0_101 = arith.constant 0 : index
    %186 = vector.load %arg11[%c0_99, %c0_100, %c0_101] : memref<2x4x256xf32, #tpu.memory_space<vmem>>, vector<1x4x256xf32>
    %187 = vector.shape_cast %186 : vector<1x4x256xf32> to vector<4x256xf32>
    %188 = vector.shape_cast %185 : vector<4x256xf32> to vector<1x4x256xf32>
    tpu.vector_store %arg11[%c0_99, %c0_100, %c0_101], %188 {strides = array<i32>} : memref<2x4x256xf32, #tpu.memory_space<vmem>>, vector<1x4x256xf32>,
    %c0_102 = arith.constant 0 : index
    %c0_103 = arith.constant 0 : index
    %c0_104 = arith.constant 0 : index
    %189 = vector.load %arg11[%c0_102, %c0_103, %c0_104] : memref<2x4x256xf32, #tpu.memory_space<vmem>>, vector<1x4x256xf32>
    %190 = vector.shape_cast %189 : vector<1x4x256xf32> to vector<4x256xf32>
    %191 = vector.extract_strided_slice %118 {offsets = [7, 0], sizes = [1, 256], strides = [1, 1]} : vector<8x256xf32> to vector<1x256xf32>
    %192 = vector.broadcast %20 : vector<4x1xf32> to vector<4x256xf32>
    %193 = vector.broadcast %191 : vector<1x256xf32> to vector<4x256xf32>
    %194 = arith.mulf %192, %193 : vector<4x256xf32>
    %195 = arith.addf %190, %194 : vector<4x256xf32>
    %c0_105 = arith.constant 0 : index
    %c0_106 = arith.constant 0 : index
    %c0_107 = arith.constant 0 : index
    %196 = vector.load %arg11[%c0_105, %c0_106, %c0_107] : memref<2x4x256xf32, #tpu.memory_space<vmem>>, vector<1x4x256xf32>
    %197 = vector.shape_cast %196 : vector<1x4x256xf32> to vector<4x256xf32>
    %198 = vector.shape_cast %195 : vector<4x256xf32> to vector<1x4x256xf32>
    tpu.vector_store %arg11[%c0_105, %c0_106, %c0_107], %198 {strides = array<i32>} : memref<2x4x256xf32, #tpu.memory_space<vmem>>, vector<1x4x256xf32>,
    %c1_108 = arith.constant 1 : index
    %c0_109 = arith.constant 0 : index
    %c0_110 = arith.constant 0 : index
    %199 = vector.load %arg1[%c1_108, %c0_109, %c0_110] : memref<2x4x256xf32, #tpu.memory_space<vmem>>, vector<1x4x256xf32>
    %200 = vector.shape_cast %199 : vector<1x4x256xf32> to vector<4x256xf32>
    %201 = vector.extract_strided_slice %200 {offsets = [0, 0], sizes = [1, 256], strides = [1, 1]} : vector<4x256xf32> to vector<1x256xf32>
    %202 = vector.broadcast %0 : vector<8x1xf32> to vector<8x256xf32>
    %203 = vector.broadcast %201 : vector<1x256xf32> to vector<8x256xf32>
    %204 = arith.mulf %202, %203 : vector<8x256xf32>
    %205 = vector.extract_strided_slice %200 {offsets = [1, 0], sizes = [1, 256], strides = [1, 1]} : vector<4x256xf32> to vector<1x256xf32>
    %206 = vector.broadcast %1 : vector<8x1xf32> to vector<8x256xf32>
    %207 = vector.broadcast %205 : vector<1x256xf32> to vector<8x256xf32>
    %208 = arith.mulf %206, %207 : vector<8x256xf32>
    %209 = arith.addf %204, %208 : vector<8x256xf32>
    %210 = vector.extract_strided_slice %200 {offsets = [2, 0], sizes = [1, 256], strides = [1, 1]} : vector<4x256xf32> to vector<1x256xf32>
    %211 = vector.broadcast %2 : vector<8x1xf32> to vector<8x256xf32>
    %212 = vector.broadcast %210 : vector<1x256xf32> to vector<8x256xf32>
    %213 = arith.mulf %211, %212 : vector<8x256xf32>
    %214 = arith.addf %209, %213 : vector<8x256xf32>
    %215 = vector.extract_strided_slice %200 {offsets = [3, 0], sizes = [1, 256], strides = [1, 1]} : vector<4x256xf32> to vector<1x256xf32>
    %216 = vector.broadcast %3 : vector<8x1xf32> to vector<8x256xf32>
    %217 = vector.broadcast %215 : vector<1x256xf32> to vector<8x256xf32>
    %218 = arith.mulf %216, %217 : vector<8x256xf32>
    %219 = arith.addf %214, %218 : vector<8x256xf32>
    %220 = vector.broadcast %21 : vector<8x1xf32> to vector<8x256xf32>
    %221 = arith.addf %219, %220 : vector<8x256xf32>
    %cst_111 = arith.constant 0.000000e+00 : f32
    %222 = vector.broadcast %cst_111 : f32 to vector<8x256xf32>
    %223 = arith.cmpf oge, %221, %222 : vector<8x256xf32>
    %224 = vector.broadcast %22 : vector<8x1xf32> to vector<8x256xf32>
    %225 = arith.mulf %224, %221 : vector<8x256xf32>
    %226 = arith.select %223, %221, %225 : vector<8x256xi1>, vector<8x256xf32>
    %c17_i32_112 = arith.constant 17 : i32
    %227 = tpu.dynamic_rotate %226 by %c17_i32_112 dim 1 : vector<8x256xf32>, i32 -> vector<8x256xf32>
    %228 = vector.broadcast %26 : vector<1x256xf32> to vector<8x256xf32>
    %229 = arith.mulf %227, %228 : vector<8x256xf32>
    %230 = vector.broadcast %4 : vector<8x1xf32> to vector<8x256xf32>
    %231 = arith.mulf %230, %229 : vector<8x256xf32>
    %c16_i32_113 = arith.constant 16 : i32
    %232 = tpu.dynamic_rotate %226 by %c16_i32_113 dim 1 : vector<8x256xf32>, i32 -> vector<8x256xf32>
    %233 = vector.broadcast %27 : vector<1x256xf32> to vector<8x256xf32>
    %234 = arith.mulf %232, %233 : vector<8x256xf32>
    %235 = vector.broadcast %5 : vector<8x1xf32> to vector<8x256xf32>
    %236 = arith.mulf %235, %234 : vector<8x256xf32>
    %237 = arith.addf %231, %236 : vector<8x256xf32>
    %c15_i32_114 = arith.constant 15 : i32
    %238 = tpu.dynamic_rotate %226 by %c15_i32_114 dim 1 : vector<8x256xf32>, i32 -> vector<8x256xf32>
    %239 = vector.broadcast %28 : vector<1x256xf32> to vector<8x256xf32>
    %240 = arith.mulf %238, %239 : vector<8x256xf32>
    %241 = vector.broadcast %6 : vector<8x1xf32> to vector<8x256xf32>
    %242 = arith.mulf %241, %240 : vector<8x256xf32>
    %243 = arith.addf %237, %242 : vector<8x256xf32>
    %c1_i32_115 = arith.constant 1 : i32
    %244 = tpu.dynamic_rotate %226 by %c1_i32_115 dim 1 : vector<8x256xf32>, i32 -> vector<8x256xf32>
    %245 = vector.broadcast %29 : vector<1x256xf32> to vector<8x256xf32>
    %246 = arith.mulf %244, %245 : vector<8x256xf32>
    %247 = vector.broadcast %7 : vector<8x1xf32> to vector<8x256xf32>
    %248 = arith.mulf %247, %246 : vector<8x256xf32>
    %249 = arith.addf %243, %248 : vector<8x256xf32>
    %250 = vector.broadcast %8 : vector<8x1xf32> to vector<8x256xf32>
    %251 = arith.mulf %250, %226 : vector<8x256xf32>
    %252 = arith.addf %249, %251 : vector<8x256xf32>
    %c255_i32_116 = arith.constant 255 : i32
    %253 = tpu.dynamic_rotate %226 by %c255_i32_116 dim 1 : vector<8x256xf32>, i32 -> vector<8x256xf32>
    %254 = vector.broadcast %30 : vector<1x256xf32> to vector<8x256xf32>
    %255 = arith.mulf %253, %254 : vector<8x256xf32>
    %256 = vector.broadcast %9 : vector<8x1xf32> to vector<8x256xf32>
    %257 = arith.mulf %256, %255 : vector<8x256xf32>
    %258 = arith.addf %252, %257 : vector<8x256xf32>
    %c241_i32_117 = arith.constant 241 : i32
    %259 = tpu.dynamic_rotate %226 by %c241_i32_117 dim 1 : vector<8x256xf32>, i32 -> vector<8x256xf32>
    %260 = vector.broadcast %31 : vector<1x256xf32> to vector<8x256xf32>
    %261 = arith.mulf %259, %260 : vector<8x256xf32>
    %262 = vector.broadcast %10 : vector<8x1xf32> to vector<8x256xf32>
    %263 = arith.mulf %262, %261 : vector<8x256xf32>
    %264 = arith.addf %258, %263 : vector<8x256xf32>
    %c240_i32_118 = arith.constant 240 : i32
    %265 = tpu.dynamic_rotate %226 by %c240_i32_118 dim 1 : vector<8x256xf32>, i32 -> vector<8x256xf32>
    %266 = vector.broadcast %32 : vector<1x256xf32> to vector<8x256xf32>
    %267 = arith.mulf %265, %266 : vector<8x256xf32>
    %268 = vector.broadcast %11 : vector<8x1xf32> to vector<8x256xf32>
    %269 = arith.mulf %268, %267 : vector<8x256xf32>
    %270 = arith.addf %264, %269 : vector<8x256xf32>
    %c239_i32_119 = arith.constant 239 : i32
    %271 = tpu.dynamic_rotate %226 by %c239_i32_119 dim 1 : vector<8x256xf32>, i32 -> vector<8x256xf32>
    %272 = vector.broadcast %33 : vector<1x256xf32> to vector<8x256xf32>
    %273 = arith.mulf %271, %272 : vector<8x256xf32>
    %274 = vector.broadcast %12 : vector<8x1xf32> to vector<8x256xf32>
    %275 = arith.mulf %274, %273 : vector<8x256xf32>
    %276 = arith.addf %270, %275 : vector<8x256xf32>
    %277 = vector.broadcast %23 : vector<8x1xf32> to vector<8x256xf32>
    %278 = arith.addf %276, %277 : vector<8x256xf32>
    %cst_120 = arith.constant 0.000000e+00 : f32
    %279 = vector.broadcast %cst_120 : f32 to vector<8x256xf32>
    %280 = arith.cmpf oge, %278, %279 : vector<8x256xf32>
    %281 = vector.broadcast %24 : vector<8x1xf32> to vector<8x256xf32>
    %282 = arith.mulf %281, %278 : vector<8x256xf32>
    %283 = arith.select %280, %278, %282 : vector<8x256xi1>, vector<8x256xf32>
    %284 = vector.extract_strided_slice %283 {offsets = [0, 0], sizes = [1, 256], strides = [1, 1]} : vector<8x256xf32> to vector<1x256xf32>
    %285 = vector.broadcast %13 : vector<4x1xf32> to vector<4x256xf32>
    %286 = vector.broadcast %284 : vector<1x256xf32> to vector<4x256xf32>
    %287 = arith.mulf %285, %286 : vector<4x256xf32>
    %288 = vector.broadcast %25 : vector<4x1xf32> to vector<4x256xf32>
    %289 = arith.addf %287, %288 : vector<4x256xf32>
    %290 = arith.addf %289, %200 : vector<4x256xf32>
    %c1_121 = arith.constant 1 : index
    %c0_122 = arith.constant 0 : index
    %c0_123 = arith.constant 0 : index
    %291 = vector.load %arg11[%c1_121, %c0_122, %c0_123] : memref<2x4x256xf32, #tpu.memory_space<vmem>>, vector<1x4x256xf32>
    %292 = vector.shape_cast %291 : vector<1x4x256xf32> to vector<4x256xf32>
    %293 = vector.shape_cast %290 : vector<4x256xf32> to vector<1x4x256xf32>
    tpu.vector_store %arg11[%c1_121, %c0_122, %c0_123], %293 {strides = array<i32>} : memref<2x4x256xf32, #tpu.memory_space<vmem>>, vector<1x4x256xf32>,
    %c1_124 = arith.constant 1 : index
    %c0_125 = arith.constant 0 : index
    %c0_126 = arith.constant 0 : index
    %294 = vector.load %arg11[%c1_124, %c0_125, %c0_126] : memref<2x4x256xf32, #tpu.memory_space<vmem>>, vector<1x4x256xf32>
    %295 = vector.shape_cast %294 : vector<1x4x256xf32> to vector<4x256xf32>
    %296 = vector.extract_strided_slice %283 {offsets = [1, 0], sizes = [1, 256], strides = [1, 1]} : vector<8x256xf32> to vector<1x256xf32>
    %297 = vector.broadcast %14 : vector<4x1xf32> to vector<4x256xf32>
    %298 = vector.broadcast %296 : vector<1x256xf32> to vector<4x256xf32>
    %299 = arith.mulf %297, %298 : vector<4x256xf32>
    %300 = arith.addf %295, %299 : vector<4x256xf32>
    %c1_127 = arith.constant 1 : index
    %c0_128 = arith.constant 0 : index
    %c0_129 = arith.constant 0 : index
    %301 = vector.load %arg11[%c1_127, %c0_128, %c0_129] : memref<2x4x256xf32, #tpu.memory_space<vmem>>, vector<1x4x256xf32>
    %302 = vector.shape_cast %301 : vector<1x4x256xf32> to vector<4x256xf32>
    %303 = vector.shape_cast %300 : vector<4x256xf32> to vector<1x4x256xf32>
    tpu.vector_store %arg11[%c1_127, %c0_128, %c0_129], %303 {strides = array<i32>} : memref<2x4x256xf32, #tpu.memory_space<vmem>>, vector<1x4x256xf32>,
    %c1_130 = arith.constant 1 : index
    %c0_131 = arith.constant 0 : index
    %c0_132 = arith.constant 0 : index
    %304 = vector.load %arg11[%c1_130, %c0_131, %c0_132] : memref<2x4x256xf32, #tpu.memory_space<vmem>>, vector<1x4x256xf32>
    %305 = vector.shape_cast %304 : vector<1x4x256xf32> to vector<4x256xf32>
    %306 = vector.extract_strided_slice %283 {offsets = [2, 0], sizes = [1, 256], strides = [1, 1]} : vector<8x256xf32> to vector<1x256xf32>
    %307 = vector.broadcast %15 : vector<4x1xf32> to vector<4x256xf32>
    %308 = vector.broadcast %306 : vector<1x256xf32> to vector<4x256xf32>
    %309 = arith.mulf %307, %308 : vector<4x256xf32>
    %310 = arith.addf %305, %309 : vector<4x256xf32>
    %c1_133 = arith.constant 1 : index
    %c0_134 = arith.constant 0 : index
    %c0_135 = arith.constant 0 : index
    %311 = vector.load %arg11[%c1_133, %c0_134, %c0_135] : memref<2x4x256xf32, #tpu.memory_space<vmem>>, vector<1x4x256xf32>
    %312 = vector.shape_cast %311 : vector<1x4x256xf32> to vector<4x256xf32>
    %313 = vector.shape_cast %310 : vector<4x256xf32> to vector<1x4x256xf32>
    tpu.vector_store %arg11[%c1_133, %c0_134, %c0_135], %313 {strides = array<i32>} : memref<2x4x256xf32, #tpu.memory_space<vmem>>, vector<1x4x256xf32>,
    %c1_136 = arith.constant 1 : index
    %c0_137 = arith.constant 0 : index
    %c0_138 = arith.constant 0 : index
    %314 = vector.load %arg11[%c1_136, %c0_137, %c0_138] : memref<2x4x256xf32, #tpu.memory_space<vmem>>, vector<1x4x256xf32>
    %315 = vector.shape_cast %314 : vector<1x4x256xf32> to vector<4x256xf32>
    %316 = vector.extract_strided_slice %283 {offsets = [3, 0], sizes = [1, 256], strides = [1, 1]} : vector<8x256xf32> to vector<1x256xf32>
    %317 = vector.broadcast %16 : vector<4x1xf32> to vector<4x256xf32>
    %318 = vector.broadcast %316 : vector<1x256xf32> to vector<4x256xf32>
    %319 = arith.mulf %317, %318 : vector<4x256xf32>
    %320 = arith.addf %315, %319 : vector<4x256xf32>
    %c1_139 = arith.constant 1 : index
    %c0_140 = arith.constant 0 : index
    %c0_141 = arith.constant 0 : index
    %321 = vector.load %arg11[%c1_139, %c0_140, %c0_141] : memref<2x4x256xf32, #tpu.memory_space<vmem>>, vector<1x4x256xf32>
    %322 = vector.shape_cast %321 : vector<1x4x256xf32> to vector<4x256xf32>
    %323 = vector.shape_cast %320 : vector<4x256xf32> to vector<1x4x256xf32>
    tpu.vector_store %arg11[%c1_139, %c0_140, %c0_141], %323 {strides = array<i32>} : memref<2x4x256xf32, #tpu.memory_space<vmem>>, vector<1x4x256xf32>,
    %c1_142 = arith.constant 1 : index
    %c0_143 = arith.constant 0 : index
    %c0_144 = arith.constant 0 : index
    %324 = vector.load %arg11[%c1_142, %c0_143, %c0_144] : memref<2x4x256xf32, #tpu.memory_space<vmem>>, vector<1x4x256xf32>
    %325 = vector.shape_cast %324 : vector<1x4x256xf32> to vector<4x256xf32>
    %326 = vector.extract_strided_slice %283 {offsets = [4, 0], sizes = [1, 256], strides = [1, 1]} : vector<8x256xf32> to vector<1x256xf32>
    %327 = vector.broadcast %17 : vector<4x1xf32> to vector<4x256xf32>
    %328 = vector.broadcast %326 : vector<1x256xf32> to vector<4x256xf32>
    %329 = arith.mulf %327, %328 : vector<4x256xf32>
    %330 = arith.addf %325, %329 : vector<4x256xf32>
    %c1_145 = arith.constant 1 : index
    %c0_146 = arith.constant 0 : index
    %c0_147 = arith.constant 0 : index
    %331 = vector.load %arg11[%c1_145, %c0_146, %c0_147] : memref<2x4x256xf32, #tpu.memory_space<vmem>>, vector<1x4x256xf32>
    %332 = vector.shape_cast %331 : vector<1x4x256xf32> to vector<4x256xf32>
    %333 = vector.shape_cast %330 : vector<4x256xf32> to vector<1x4x256xf32>
    tpu.vector_store %arg11[%c1_145, %c0_146, %c0_147], %333 {strides = array<i32>} : memref<2x4x256xf32, #tpu.memory_space<vmem>>, vector<1x4x256xf32>,
    %c1_148 = arith.constant 1 : index
    %c0_149 = arith.constant 0 : index
    %c0_150 = arith.constant 0 : index
    %334 = vector.load %arg11[%c1_148, %c0_149, %c0_150] : memref<2x4x256xf32, #tpu.memory_space<vmem>>, vector<1x4x256xf32>
    %335 = vector.shape_cast %334 : vector<1x4x256xf32> to vector<4x256xf32>
    %336 = vector.extract_strided_slice %283 {offsets = [5, 0], sizes = [1, 256], strides = [1, 1]} : vector<8x256xf32> to vector<1x256xf32>
    %337 = vector.broadcast %18 : vector<4x1xf32> to vector<4x256xf32>
    %338 = vector.broadcast %336 : vector<1x256xf32> to vector<4x256xf32>
    %339 = arith.mulf %337, %338 : vector<4x256xf32>
    %340 = arith.addf %335, %339 : vector<4x256xf32>
    %c1_151 = arith.constant 1 : index
    %c0_152 = arith.constant 0 : index
    %c0_153 = arith.constant 0 : index
    %341 = vector.load %arg11[%c1_151, %c0_152, %c0_153] : memref<2x4x256xf32, #tpu.memory_space<vmem>>, vector<1x4x256xf32>
    %342 = vector.shape_cast %341 : vector<1x4x256xf32> to vector<4x256xf32>
    %343 = vector.shape_cast %340 : vector<4x256xf32> to vector<1x4x256xf32>
    tpu.vector_store %arg11[%c1_151, %c0_152, %c0_153], %343 {strides = array<i32>} : memref<2x4x256xf32, #tpu.memory_space<vmem>>, vector<1x4x256xf32>,
    %c1_154 = arith.constant 1 : index
    %c0_155 = arith.constant 0 : index
    %c0_156 = arith.constant 0 : index
    %344 = vector.load %arg11[%c1_154, %c0_155, %c0_156] : memref<2x4x256xf32, #tpu.memory_space<vmem>>, vector<1x4x256xf32>
    %345 = vector.shape_cast %344 : vector<1x4x256xf32> to vector<4x256xf32>
    %346 = vector.extract_strided_slice %283 {offsets = [6, 0], sizes = [1, 256], strides = [1, 1]} : vector<8x256xf32> to vector<1x256xf32>
    %347 = vector.broadcast %19 : vector<4x1xf32> to vector<4x256xf32>
    %348 = vector.broadcast %346 : vector<1x256xf32> to vector<4x256xf32>
    %349 = arith.mulf %347, %348 : vector<4x256xf32>
    %350 = arith.addf %345, %349 : vector<4x256xf32>
    %c1_157 = arith.constant 1 : index
    %c0_158 = arith.constant 0 : index
    %c0_159 = arith.constant 0 : index
    %351 = vector.load %arg11[%c1_157, %c0_158, %c0_159] : memref<2x4x256xf32, #tpu.memory_space<vmem>>, vector<1x4x256xf32>
    %352 = vector.shape_cast %351 : vector<1x4x256xf32> to vector<4x256xf32>
    %353 = vector.shape_cast %350 : vector<4x256xf32> to vector<1x4x256xf32>
    tpu.vector_store %arg11[%c1_157, %c0_158, %c0_159], %353 {strides = array<i32>} : memref<2x4x256xf32, #tpu.memory_space<vmem>>, vector<1x4x256xf32>,
    %c1_160 = arith.constant 1 : index
    %c0_161 = arith.constant 0 : index
    %c0_162 = arith.constant 0 : index
    %354 = vector.load %arg11[%c1_160, %c0_161, %c0_162] : memref<2x4x256xf32, #tpu.memory_space<vmem>>, vector<1x4x256xf32>
    %355 = vector.shape_cast %354 : vector<1x4x256xf32> to vector<4x256xf32>
    %356 = vector.extract_strided_slice %283 {offsets = [7, 0], sizes = [1, 256], strides = [1, 1]} : vector<8x256xf32> to vector<1x256xf32>
    %357 = vector.broadcast %20 : vector<4x1xf32> to vector<4x256xf32>
    %358 = vector.broadcast %356 : vector<1x256xf32> to vector<4x256xf32>
    %359 = arith.mulf %357, %358 : vector<4x256xf32>
    %360 = arith.addf %355, %359 : vector<4x256xf32>
    %c1_163 = arith.constant 1 : index
    %c0_164 = arith.constant 0 : index
    %c0_165 = arith.constant 0 : index
    %361 = vector.load %arg11[%c1_163, %c0_164, %c0_165] : memref<2x4x256xf32, #tpu.memory_space<vmem>>, vector<1x4x256xf32>
    %362 = vector.shape_cast %361 : vector<1x4x256xf32> to vector<4x256xf32>
    %363 = vector.shape_cast %360 : vector<4x256xf32> to vector<1x4x256xf32>
    tpu.vector_store %arg11[%c1_163, %c0_164, %c0_165], %363 {strides = array<i32>} : memref<2x4x256xf32, #tpu.memory_space<vmem>>, vector<1x4x256xf32>,
    return
  }
  func.func @transform_0(%arg0: i32) -> (i32, i32, i32) {
    %c0_i32 = arith.constant 0 : i32
    %c0_i32_0 = arith.constant 0 : i32
    %c0_i32_1 = arith.constant 0 : i32
    %c0_i32_2 = arith.constant 0 : i32
    return %c0_i32, %c0_i32_0, %c0_i32_1 : i32, i32, i32
  }
  func.func @transform_1(%arg0: i32) -> (i32, i32) {
    %c0_i32 = arith.constant 0 : i32
    %c0_i32_0 = arith.constant 0 : i32
    %c0_i32_1 = arith.constant 0 : i32
    return %c0_i32, %c0_i32_0 : i32, i32
  }
  func.func @transform_2(%arg0: i32) -> (i32, i32) {
    %c0_i32 = arith.constant 0 : i32
    %c0_i32_0 = arith.constant 0 : i32
    %c0_i32_1 = arith.constant 0 : i32
    return %c0_i32, %c0_i32_0 : i32, i32
  }
  func.func @transform_3(%arg0: i32) -> (i32, i32) {
    %c0_i32 = arith.constant 0 : i32
    %c0_i32_0 = arith.constant 0 : i32
    %c0_i32_1 = arith.constant 0 : i32
    return %c0_i32, %c0_i32_0 : i32, i32
  }
  func.func @transform_4(%arg0: i32) -> (i32, i32) {
    %c0_i32 = arith.constant 0 : i32
    %c0_i32_0 = arith.constant 0 : i32
    %c0_i32_1 = arith.constant 0 : i32
    return %c0_i32, %c0_i32_0 : i32, i32
  }
  func.func @transform_5(%arg0: i32) -> (i32, i32) {
    %c0_i32 = arith.constant 0 : i32
    %c0_i32_0 = arith.constant 0 : i32
    %c0_i32_1 = arith.constant 0 : i32
    return %c0_i32, %c0_i32_0 : i32, i32
  }
  func.func @transform_6(%arg0: i32) -> (i32, i32) {
    %c0_i32 = arith.constant 0 : i32
    %c0_i32_0 = arith.constant 0 : i32
    %c0_i32_1 = arith.constant 0 : i32
    return %c0_i32, %c0_i32_0 : i32, i32
  }
  func.func @transform_7(%arg0: i32) -> (i32, i32) {
    %c0_i32 = arith.constant 0 : i32
    %c0_i32_0 = arith.constant 0 : i32
    %c0_i32_1 = arith.constant 0 : i32
    return %c0_i32, %c0_i32_0 : i32, i32
  }
  func.func @transform_8(%arg0: i32) -> (i32, i32) {
    %c0_i32 = arith.constant 0 : i32
    %c0_i32_0 = arith.constant 0 : i32
    %c0_i32_1 = arith.constant 0 : i32
    return %c0_i32, %c0_i32_0 : i32, i32
  }
  func.func @transform_9(%arg0: i32) -> (i32, i32) {
    %c0_i32 = arith.constant 0 : i32
    %c0_i32_0 = arith.constant 0 : i32
    %c0_i32_1 = arith.constant 0 : i32
    return %c0_i32, %c0_i32_0 : i32, i32
  }
  func.func @transform_10(%arg0: i32) -> (i32, i32, i32) {
    %c0_i32 = arith.constant 0 : i32
    %c0_i32_0 = arith.constant 0 : i32
    %c0_i32_1 = arith.constant 0 : i32
    %c0_i32_2 = arith.constant 0 : i32
    return %c0_i32, %c0_i32_0, %c0_i32_1 : i32, i32, i32
  }
}

</mosaic_0001>

<llo_original>
// kernel: squeeze.4
$region0: #{squeeze.4}
  %s0 = inlined_call_operand.vmem [shape: f32[8,3,3], index: 0, kind: input, shape index: {}]
  %s1 = inlined_call_operand.vmem [shape: f32[8,9], index: 1, kind: output, shape index: {}]
  $region1: #{squeeze.4} parent=0
    #allocation0 [shape = 'u8[12288]{0}', space=vmem, size = 0x3000, scoped, tag = 'scoped mem for input reshape']
    %s3 = sshllo.u32 0, 4
    %s4 = smul.addr 4, 2
    %s5 = scalar_lea.vmem %s0, %s4
    %v6 = vld [vmem:[%s5] sm:%s3]
    %s7 = scalar_lea.vmem [#allocation0], 16
    %8 = vst [vmem:[%s7] sm:%s3] %v6
    %s9 = scalar_lea.vmem %s0, 4
    %v10 = vld [vmem:[%s9] sm:%s3]
    %s11 = scalar_lea.vmem [#allocation0], 8
    %12 = vst [vmem:[%s11] sm:%s3] %v10
    %v13 = vld [vmem:[%s0] sm:%s3]
    %14 = vst [vmem:[#allocation0] sm:%s3] %v13
    %v15 = vld [vmem:[#allocation0] sm:$0x7]
    %vm16 = vcmask 64512
    %17 = vst.msk [vmem:[%s1] sm:$0x7] %vm16, %v15
    %s18 = scalar_lea.vmem [#allocation0], 8
    %v19 = vld [vmem:[%s18] sm:$0x7]
    %vm20 = vcmask 64512
    %s21 = scalar_lea.vmem %s1, 3
    %22 = vst.msk [vmem:[%s21] sm:$0x7] %vm20, %v19
    %s23 = scalar_lea.vmem [#allocation0], 16
    %v24 = vld [vmem:[%s23] sm:$0x7]
    %vm25 = vcmask 64512
    %s26 = scalar_lea.vmem %s1, 6
    %27 = vst.msk [vmem:[%s26] sm:$0x7] %vm25, %v24

// kernel: bottleneck_forward.1
$region0: #{bottleneck_forward.1}
  #allocation0 [shape = 'u32[]', space=smem, size = 0x4, offset = 0x4, fixed_abs, tag = 'smem constant byte address 0x4 - core index']
  #allocation1 [shape = 'u32[144,128]{1,0:T(1,128)}', space=vmem, size = 0x12000, scoped, tag = 'internal scratch']
  %s0 = inlined_call_operand.vmem [shape: f32[2,4,256], index: 0, kind: input, shape index: {}]
  %s1 = inlined_call_operand.vmem [shape: f32[8,4], index: 1, kind: input, shape index: {}]
  %s2 = inlined_call_operand.vmem [shape: f32[8,1], index: 2, kind: input, shape index: {}]
  %s3 = inlined_call_operand.vmem [shape: f32[8,1], index: 3, kind: input, shape index: {}]
  %s4 = inlined_call_operand.vmem [shape: f32[8,9], index: 4, kind: input, shape index: {}]
  %s5 = inlined_call_operand.vmem [shape: f32[8,1], index: 5, kind: input, shape index: {}]
  %s6 = inlined_call_operand.vmem [shape: f32[8,1], index: 6, kind: input, shape index: {}]
  %s7 = inlined_call_operand.vmem [shape: f32[4,8], index: 7, kind: input, shape index: {}]
  %s8 = inlined_call_operand.vmem [shape: f32[4,1], index: 8, kind: input, shape index: {}]
  %s9 = inlined_call_operand.vmem [shape: f32[9,256], index: 9, kind: input, shape index: {}]
  %s10 = inlined_call_operand.vmem [shape: f32[2,4,256], index: 10, kind: output, shape index: {}]
  %s11 = sld [smem:[#allocation0]]
  $region50: #{bottleneck_forward.1} parent=0
    _
  %s13 = ssub.s32 1, %s11
  %s14 = scalar_select 0, %s13, %s11
  // Predicated region
  $region2: #{bottleneck_forward.1} parent=0 // pred_check
    _
  $region3: #{bottleneck_forward.1} parent=0 // pred_check_branch
    %16 = sbr.rel (0) target = $region5
  $region4: #{bottleneck_forward.1} parent=0 // pred_region
    _
  $region5: #{bottleneck_forward.1} parent=0 // pred_fallthru
    _
  // Predicated region
  $region6: #{bottleneck_forward.1} parent=0 // pred_check
    _
  $region7: #{bottleneck_forward.1} parent=0 // pred_check_branch
    %18 = sbr.rel (0) target = $region9
  $region8: #{bottleneck_forward.1} parent=0 // pred_region
    _
  $region9: #{bottleneck_forward.1} parent=0 // pred_fallthru
    _
  // Predicated region
  $region10: #{bottleneck_forward.1} parent=0 // pred_check
    _
  $region11: #{bottleneck_forward.1} parent=0 // pred_check_branch
    %20 = sbr.rel (0) target = $region13
  $region12: #{bottleneck_forward.1} parent=0 // pred_region
    _
  $region13: #{bottleneck_forward.1} parent=0 // pred_fallthru
    _
  // Predicated region
  $region14: #{bottleneck_forward.1} parent=0 // pred_check
    _
  $region15: #{bottleneck_forward.1} parent=0 // pred_check_branch
    %22 = sbr.rel (0) target = $region17
  $region16: #{bottleneck_forward.1} parent=0 // pred_region
    _
  $region17: #{bottleneck_forward.1} parent=0 // pred_fallthru
    _
  // Predicated region
  $region18: #{bottleneck_forward.1} parent=0 // pred_check
    _
  $region19: #{bottleneck_forward.1} parent=0 // pred_check_branch
    %24 = sbr.rel (0) target = $region21
  $region20: #{bottleneck_forward.1} parent=0 // pred_region
    _
  $region21: #{bottleneck_forward.1} parent=0 // pred_fallthru
    _
  // Predicated region
  $region22: #{bottleneck_forward.1} parent=0 // pred_check
    _
  $region23: #{bottleneck_forward.1} parent=0 // pred_check_branch
    %26 = sbr.rel (0) target = $region25
  $region24: #{bottleneck_forward.1} parent=0 // pred_region
    _
  $region25: #{bottleneck_forward.1} parent=0 // pred_fallthru
    _
  // Predicated region
  $region26: #{bottleneck_forward.1} parent=0 // pred_check
    _
  $region27: #{bottleneck_forward.1} parent=0 // pred_check_branch
    %28 = sbr.rel (0) target = $region29
  $region28: #{bottleneck_forward.1} parent=0 // pred_region
    _
  $region29: #{bottleneck_forward.1} parent=0 // pred_fallthru
    _
  // Predicated region
  $region30: #{bottleneck_forward.1} parent=0 // pred_check
    _
  $region31: #{bottleneck_forward.1} parent=0 // pred_check_branch
    %30 = sbr.rel (0) target = $region33
  $region32: #{bottleneck_forward.1} parent=0 // pred_region
    _
  $region33: #{bottleneck_forward.1} parent=0 // pred_fallthru
    _
  // Predicated region
  $region34: #{bottleneck_forward.1} parent=0 // pred_check
    _
  $region35: #{bottleneck_forward.1} parent=0 // pred_check_branch
    %32 = sbr.rel (0) target = $region37
  $region36: #{bottleneck_forward.1} parent=0 // pred_region
    _
  $region37: #{bottleneck_forward.1} parent=0 // pred_fallthru
    _
  // Predicated region
  $region38: #{bottleneck_forward.1} parent=0 // pred_check
    _
  $region39: #{bottleneck_forward.1} parent=0 // pred_check_branch
    %34 = sbr.rel (0) target = $region41
  $region40: #{bottleneck_forward.1} parent=0 // pred_region
    _
  $region41: #{bottleneck_forward.1} parent=0 // pred_fallthru
    _
  %v35 = vld [vmem:[%s1] sm:$0xff]
  %v36 = vld [vmem:[%s4] sm:$0xff]
  %v37 = vld [vmem:[%s7] sm:$0xf]
  %v38 = vld [vmem:[%s2] sm:$0xff]
  %v39 = vld [vmem:[%s3] sm:$0xff]
  %v40 = vld [vmem:[%s5] sm:$0xff]
  %v41 = vld [vmem:[%s6] sm:$0xff]
  %v42 = vld [vmem:[%s8] sm:$0xf]
  %v43 = vld [vmem:[%s9] ss:$8 sm:$0x3]
  %s44 = scalar_lea.vmem %s9, 1
  %v45 = vld [vmem:[%s44] ss:$8 sm:$0x3]
  %s46 = scalar_lea.vmem %s9, 2
  %v47 = vld [vmem:[%s46] ss:$8 sm:$0x3]
  %s48 = scalar_lea.vmem %s9, 3
  %v49 = vld [vmem:[%s48] ss:$8 sm:$0x3]
  %s50 = scalar_lea.vmem %s9, 5
  %v51 = vld [vmem:[%s50] ss:$8 sm:$0x3]
  %s52 = scalar_lea.vmem %s9, 6
  %v53 = vld [vmem:[%s52] ss:$8 sm:$0x3]
  %s54 = scalar_lea.vmem %s9, 7
  %v55 = vld [vmem:[%s54] ss:$8 sm:$0x3]
  %s56 = scalar_lea.vmem %s9, 16
  %v57 = vld [vmem:[%s56] ss:$8 sm:$0x3]
  %v58 = vld [vmem:[%s0] sm:$0xff]
  %60 = vset.pattern.permute.xlu0 0
  %61 = vperm.xlu0 %60, %v35
  %v62 = vpop.permute.xlu0 %61
  %v65 = vlaneseq
  %v66 = vshrl.u32 %v65, 7
  %v67 = vsub.s32 0, %v66
  %v68 = vrot.slane %v58, %v67
  %v69 = vlaneseq
  %v70 = vshrl.u32 %v69, 7
  %v71 = vsub.s32 4, %v70
  %v72 = vrot.slane %v58, %v71
  %v75 = vlaneseq
  %v76 = vshrl.u32 %v75, 7
  %v77 = vsub.s32 0, %v76
  %v78 = vrot.slane %v68, %v77
  %v79 = vlaneseq
  %v80 = vshrl.u32 %v79, 7
  %v81 = vsub.s32 0, %v80
  %v82 = vrot.slane %v72, %v81
  %v83 = vmul.f32 %v62, %v78
  %v84 = vmul.f32 %v62, %v82
  %85 = vset.pattern.permute.xlu0 1
  %86 = vperm.xlu0 %85, %v35
  %v87 = vpop.permute.xlu0 %86
  %v89 = vlaneseq
  %v90 = vshrl.u32 %v89, 7
  %v91 = vsub.s32 1, %v90
  %v92 = vrot.slane %v58, %v91
  %v93 = vlaneseq
  %v94 = vshrl.u32 %v93, 7
  %v95 = vsub.s32 5, %v94
  %v96 = vrot.slane %v58, %v95
  %v99 = vlaneseq
  %v100 = vshrl.u32 %v99, 7
  %v101 = vsub.s32 1, %v100
  %v102 = vrot.slane %v92, %v101
  %v103 = vlaneseq
  %v104 = vshrl.u32 %v103, 7
  %v105 = vsub.s32 1, %v104
  %v106 = vrot.slane %v96, %v105
  %v107 = vmul.f32 %v87, %v102
  %v108 = vmul.f32 %v87, %v106
  %v109 = vadd.f32 %v83, %v107
  %v110 = vadd.f32 %v84, %v108
  %111 = vset.pattern.permute.xlu0 2
  %112 = vperm.xlu0 %111, %v35
  %v113 = vpop.permute.xlu0 %112
  %v115 = vlaneseq
  %v116 = vshrl.u32 %v115, 7
  %v117 = vsub.s32 2, %v116
  %v118 = vrot.slane %v58, %v117
  %v119 = vlaneseq
  %v120 = vshrl.u32 %v119, 7
  %v121 = vsub.s32 6, %v120
  %v122 = vrot.slane %v58, %v121
  %v125 = vlaneseq
  %v126 = vshrl.u32 %v125, 7
  %v127 = vsub.s32 2, %v126
  %v128 = vrot.slane %v118, %v127
  %v129 = vlaneseq
  %v130 = vshrl.u32 %v129, 7
  %v131 = vsub.s32 2, %v130
  %v132 = vrot.slane %v122, %v131
  %v133 = vmul.f32 %v113, %v128
  %v134 = vmul.f32 %v113, %v132
  %v135 = vadd.f32 %v109, %v133
  %v136 = vadd.f32 %v110, %v134
  %137 = vset.pattern.permute.xlu0 3
  %138 = vperm.xlu0 %137, %v35
  %v139 = vpop.permute.xlu0 %138
  %v141 = vlaneseq
  %v142 = vshrl.u32 %v141, 7
  %v143 = vsub.s32 3, %v142
  %v144 = vrot.slane %v58, %v143
  %v145 = vlaneseq
  %v146 = vshrl.u32 %v145, 7
  %v147 = vsub.s32 7, %v146
  %v148 = vrot.slane %v58, %v147
  %v151 = vlaneseq
  %v152 = vshrl.u32 %v151, 7
  %v153 = vsub.s32 3, %v152
  %v154 = vrot.slane %v144, %v153
  %v155 = vlaneseq
  %v156 = vshrl.u32 %v155, 7
  %v157 = vsub.s32 3, %v156
  %v158 = vrot.slane %v148, %v157
  %v159 = vmul.f32 %v139, %v154
  %v160 = vmul.f32 %v139, %v158
  %v161 = vadd.f32 %v135, %v159
  %v162 = vadd.f32 %v136, %v160
  %164 = vset.pattern.permute.xlu0 0
  %165 = vperm.xlu0 %164, %v38
  %v166 = vpop.permute.xlu0 %165
  %v168 = vadd.f32 %v161, %v166
  %v169 = vadd.f32 %v162, %v166
  %vm170 = vcmp.ge.f32.partialorder %v168, 0.0
  %vm171 = vcmp.ge.f32.partialorder %v169, 0.0
  %173 = vset.pattern.permute.xlu0 0
  %174 = vperm.xlu0 %173, %v39
  %v175 = vpop.permute.xlu0 %174
  %v177 = vmul.f32 %v175, %v168
  %v178 = vmul.f32 %v175, %v169
  %v179 = vsel %vm170, %v168, %v177
  %v180 = vsel %vm171, %v169, %v178
  %181 = vrot.lane.b32.xlu0 %v179, 17
  %v182 = vpop.permute.xlu0 %181
  %183 = vrot.lane.b32.xlu0 %v180, 17
  %v184 = vpop.permute.xlu0 %183
  %v185 = vlaneseq
  %v186 = vand.u32 %v185, 127
  %vm187 = vcmp.lt.s32.totalorder %v186, 17
  %v188 = vsel %vm187, %v182, %v184
  %v189 = vsel %vm187, %v184, %v182
  %v191 = vlaneseq
  %v192 = vshrl.u32 %v191, 7
  %v193 = vsub.s32 0, %v192
  %v194 = vrot.slane %v43, %v193
  %v195 = vlaneseq
  %v196 = vshrl.u32 %v195, 7
  %v197 = vsub.s32 1, %v196
  %v198 = vrot.slane %v43, %v197
  %v201 = vmul.f32 %v189, %v194
  %v202 = vmul.f32 %v188, %v198
  %204 = vset.pattern.permute.xlu0 0
  %205 = vperm.xlu0 %204, %v36
  %v206 = vpop.permute.xlu0 %205
  %v208 = vmul.f32 %v206, %v201
  %v209 = vmul.f32 %v206, %v202
  %210 = vrot.lane.b32.xlu0 %v179, 16
  %v211 = vpop.permute.xlu0 %210
  %212 = vrot.lane.b32.xlu0 %v180, 16
  %v213 = vpop.permute.xlu0 %212
  %vm214 = vcmp.lt.s32.totalorder %v186, 16
  %v215 = vsel %vm214, %v211, %v213
  %v216 = vsel %vm214, %v213, %v211
  %v218 = vlaneseq
  %v219 = vshrl.u32 %v218, 7
  %v220 = vsub.s32 0, %v219
  %v221 = vrot.slane %v45, %v220
  %v222 = vlaneseq
  %v223 = vshrl.u32 %v222, 7
  %v224 = vsub.s32 1, %v223
  %v225 = vrot.slane %v45, %v224
  %v228 = vmul.f32 %v216, %v221
  %v229 = vmul.f32 %v215, %v225
  %230 = vset.pattern.permute.xlu0 1
  %231 = vperm.xlu0 %230, %v36
  %v232 = vpop.permute.xlu0 %231
  %v234 = vmul.f32 %v232, %v228
  %v235 = vmul.f32 %v232, %v229
  %v236 = vadd.f32 %v208, %v234
  %v237 = vadd.f32 %v209, %v235
  %238 = vrot.lane.b32.xlu0 %v179, 15
  %v239 = vpop.permute.xlu0 %238
  %240 = vrot.lane.b32.xlu0 %v180, 15
  %v241 = vpop.permute.xlu0 %240
  %vm242 = vcmp.lt.s32.totalorder %v186, 15
  %v243 = vsel %vm242, %v239, %v241
  %v244 = vsel %vm242, %v241, %v239
  %v246 = vlaneseq
  %v247 = vshrl.u32 %v246, 7
  %v248 = vsub.s32 0, %v247
  %v249 = vrot.slane %v47, %v248
  %v250 = vlaneseq
  %v251 = vshrl.u32 %v250, 7
  %v252 = vsub.s32 1, %v251
  %v253 = vrot.slane %v47, %v252
  %v256 = vmul.f32 %v244, %v249
  %v257 = vmul.f32 %v243, %v253
  %258 = vset.pattern.permute.xlu0 2
  %259 = vperm.xlu0 %258, %v36
  %v260 = vpop.permute.xlu0 %259
  %v262 = vmul.f32 %v260, %v256
  %v263 = vmul.f32 %v260, %v257
  %v264 = vadd.f32 %v236, %v262
  %v265 = vadd.f32 %v237, %v263
  %266 = vrot.lane.b32.xlu0 %v179, 1
  %v267 = vpop.permute.xlu0 %266
  %268 = vrot.lane.b32.xlu0 %v180, 1
  %v269 = vpop.permute.xlu0 %268
  %vm270 = vcmp.lt.s32.totalorder %v186, 1
  %v271 = vsel %vm270, %v267, %v269
  %v272 = vsel %vm270, %v269, %v267
  %v274 = vlaneseq
  %v275 = vshrl.u32 %v274, 7
  %v276 = vsub.s32 0, %v275
  %v277 = vrot.slane %v49, %v276
  %v278 = vlaneseq
  %v279 = vshrl.u32 %v278, 7
  %v280 = vsub.s32 1, %v279
  %v281 = vrot.slane %v49, %v280
  %v284 = vmul.f32 %v272, %v277
  %v285 = vmul.f32 %v271, %v281
  %286 = vset.pattern.permute.xlu0 3
  %287 = vperm.xlu0 %286, %v36
  %v288 = vpop.permute.xlu0 %287
  %v290 = vmul.f32 %v288, %v284
  %v291 = vmul.f32 %v288, %v285
  %v292 = vadd.f32 %v264, %v290
  %v293 = vadd.f32 %v265, %v291
  %294 = vset.pattern.permute.xlu0 4
  %295 = vperm.xlu0 %294, %v36
  %v296 = vpop.permute.xlu0 %295
  %v298 = vmul.f32 %v296, %v179
  %v299 = vmul.f32 %v296, %v180
  %v300 = vadd.f32 %v292, %v298
  %v301 = vadd.f32 %v293, %v299
  %302 = vrot.lane.b32.xlu0 %v179, 127
  %v303 = vpop.permute.xlu0 %302
  %304 = vrot.lane.b32.xlu0 %v180, 127
  %v305 = vpop.permute.xlu0 %304
  %vm306 = vcmp.lt.s32.totalorder %v186, 127
  %v307 = vsel %vm306, %v303, %v305
  %v308 = vsel %vm306, %v305, %v303
  %v310 = vlaneseq
  %v311 = vshrl.u32 %v310, 7
  %v312 = vsub.s32 0, %v311
  %v313 = vrot.slane %v51, %v312
  %v314 = vlaneseq
  %v315 = vshrl.u32 %v314, 7
  %v316 = vsub.s32 1, %v315
  %v317 = vrot.slane %v51, %v316
  %v320 = vmul.f32 %v307, %v313
  %v321 = vmul.f32 %v308, %v317
  %322 = vset.pattern.permute.xlu0 5
  %323 = vperm.xlu0 %322, %v36
  %v324 = vpop.permute.xlu0 %323
  %v326 = vmul.f32 %v324, %v320
  %v327 = vmul.f32 %v324, %v321
  %v328 = vadd.f32 %v300, %v326
  %v329 = vadd.f32 %v301, %v327
  %330 = vrot.lane.b32.xlu0 %v179, 113
  %v331 = vpop.permute.xlu0 %330
  %332 = vrot.lane.b32.xlu0 %v180, 113
  %v333 = vpop.permute.xlu0 %332
  %vm334 = vcmp.lt.s32.totalorder %v186, 113
  %v335 = vsel %vm334, %v331, %v333
  %v336 = vsel %vm334, %v333, %v331
  %v338 = vlaneseq
  %v339 = vshrl.u32 %v338, 7
  %v340 = vsub.s32 0, %v339
  %v341 = vrot.slane %v53, %v340
  %v342 = vlaneseq
  %v343 = vshrl.u32 %v342, 7
  %v344 = vsub.s32 1, %v343
  %v345 = vrot.slane %v53, %v344
  %v348 = vmul.f32 %v335, %v341
  %v349 = vmul.f32 %v336, %v345
  %350 = vset.pattern.permute.xlu0 6
  %351 = vperm.xlu0 %350, %v36
  %v352 = vpop.permute.xlu0 %351
  %v354 = vmul.f32 %v352, %v348
  %v355 = vmul.f32 %v352, %v349
  %v356 = vadd.f32 %v328, %v354
  %v357 = vadd.f32 %v329, %v355
  %358 = vrot.lane.b32.xlu0 %v179, 112
  %v359 = vpop.permute.xlu0 %358
  %360 = vrot.lane.b32.xlu0 %v180, 112
  %v361 = vpop.permute.xlu0 %360
  %vm362 = vcmp.lt.s32.totalorder %v186, 112
  %v363 = vsel %vm362, %v359, %v361
  %v364 = vsel %vm362, %v361, %v359
  %v366 = vlaneseq
  %v367 = vshrl.u32 %v366, 7
  %v368 = vsub.s32 0, %v367
  %v369 = vrot.slane %v55, %v368
  %v370 = vlaneseq
  %v371 = vshrl.u32 %v370, 7
  %v372 = vsub.s32 1, %v371
  %v373 = vrot.slane %v55, %v372
  %v376 = vmul.f32 %v363, %v369
  %v377 = vmul.f32 %v364, %v373
  %378 = vset.pattern.permute.xlu0 7
  %379 = vperm.xlu0 %378, %v36
  %v380 = vpop.permute.xlu0 %379
  %v382 = vmul.f32 %v380, %v376
  %v383 = vmul.f32 %v380, %v377
  %v384 = vadd.f32 %v356, %v382
  %v385 = vadd.f32 %v357, %v383
  %386 = vrot.lane.b32.xlu0 %v179, 111
  %v387 = vpop.permute.xlu0 %386
  %388 = vrot.lane.b32.xlu0 %v180, 111
  %v389 = vpop.permute.xlu0 %388
  %vm390 = vcmp.lt.s32.totalorder %v186, 111
  %v391 = vsel %vm390, %v387, %v389
  %v392 = vsel %vm390, %v389, %v387
  %v394 = vlaneseq
  %v395 = vshrl.u32 %v394, 7
  %v396 = vsub.s32 0, %v395
  %v397 = vrot.slane %v57, %v396
  %v398 = vlaneseq
  %v399 = vshrl.u32 %v398, 7
  %v400 = vsub.s32 1, %v399
  %v401 = vrot.slane %v57, %v400
  %v404 = vmul.f32 %v391, %v397
  %v405 = vmul.f32 %v392, %v401
  %406 = vset.pattern.permute.xlu0 8
  %407 = vperm.xlu0 %406, %v36
  %v408 = vpop.permute.xlu0 %407
  %v410 = vmul.f32 %v408, %v404
  %v411 = vmul.f32 %v408, %v405
  %v412 = vadd.f32 %v384, %v410
  %v413 = vadd.f32 %v385, %v411
  %415 = vset.pattern.permute.xlu0 0
  %416 = vperm.xlu0 %415, %v40
  %v417 = vpop.permute.xlu0 %416
  %v419 = vadd.f32 %v412, %v417
  %v420 = vadd.f32 %v413, %v417
  %vm421 = vcmp.ge.f32.partialorder %v419, 0.0
  %vm422 = vcmp.ge.f32.partialorder %v420, 0.0
  %424 = vset.pattern.permute.xlu0 0
  %425 = vperm.xlu0 %424, %v41
  %v426 = vpop.permute.xlu0 %425
  %v428 = vmul.f32 %v426, %v419
  %v429 = vmul.f32 %v426, %v420
  %v430 = vsel %vm421, %v419, %v428
  %v431 = vsel %vm422, %v420, %v429
  %433 = vset.pattern.permute.xlu0 0
  %434 = vperm.xlu0 %433, %v37
  %v435 = vpop.permute.xlu0 %434
  %v437 = vlaneseq
  %v438 = vshrl.u32 %v437, 7
  %v439 = vsub.s32 0, %v438
  %v440 = vrot.slane %v430, %v439
  %v441 = vlaneseq
  %v442 = vshrl.u32 %v441, 7
  %v443 = vsub.s32 0, %v442
  %v444 = vrot.slane %v431, %v443
  %v445 = vmul.f32 %v435, %v440
  %v446 = vmul.f32 %v435, %v444
  %448 = vset.pattern.permute.xlu0 0
  %449 = vperm.xlu0 %448, %v42
  %v450 = vpop.permute.xlu0 %449
  %v452 = vadd.f32 %v445, %v450
  %v453 = vadd.f32 %v446, %v450
  %v454 = vcombine.high %v58, %v58
  %v456 = vadd.f32 %v452, %v58
  %v457 = vadd.f32 %v453, %v454
  %v460 = vcombine.low %v456, %v457
  %462 = vst [vmem:[%s10] sm:$0xff] %v460
  %v463 = vld [vmem:[%s10] sm:$0xff]
  %464 = vset.pattern.permute.xlu0 1
  %465 = vperm.xlu0 %464, %v37
  %v466 = vpop.permute.xlu0 %465
  %v468 = vlaneseq
  %v469 = vshrl.u32 %v468, 7
  %v470 = vsub.s32 1, %v469
  %v471 = vrot.slane %v430, %v470
  %v472 = vlaneseq
  %v473 = vshrl.u32 %v472, 7
  %v474 = vsub.s32 1, %v473
  %v475 = vrot.slane %v431, %v474
  %v476 = vmul.f32 %v466, %v471
  %v477 = vmul.f32 %v466, %v475
  %v480 = vcombine.low %v476, %v477
  %v482 = vadd.f32 %v463, %v480
  %483 = vst [vmem:[%s10] sm:$0xff] %v482
  %v484 = vld [vmem:[%s10] sm:$0xff]
  %485 = vset.pattern.permute.xlu0 2
  %486 = vperm.xlu0 %485, %v37
  %v487 = vpop.permute.xlu0 %486
  %v489 = vlaneseq
  %v490 = vshrl.u32 %v489, 7
  %v491 = vsub.s32 2, %v490
  %v492 = vrot.slane %v430, %v491
  %v493 = vlaneseq
  %v494 = vshrl.u32 %v493, 7
  %v495 = vsub.s32 2, %v494
  %v496 = vrot.slane %v431, %v495
  %v497 = vmul.f32 %v487, %v492
  %v498 = vmul.f32 %v487, %v496
  %v501 = vcombine.low %v497, %v498
  %v503 = vadd.f32 %v484, %v501
  %504 = vst [vmem:[%s10] sm:$0xff] %v503
  %v505 = vld [vmem:[%s10] sm:$0xff]
  %506 = vset.pattern.permute.xlu0 3
  %507 = vperm.xlu0 %506, %v37
  %v508 = vpop.permute.xlu0 %507
  %v510 = vlaneseq
  %v511 = vshrl.u32 %v510, 7
  %v512 = vsub.s32 3, %v511
  %v513 = vrot.slane %v430, %v512
  %v514 = vlaneseq
  %v515 = vshrl.u32 %v514, 7
  %v516 = vsub.s32 3, %v515
  %v517 = vrot.slane %v431, %v516
  %v518 = vmul.f32 %v508, %v513
  %v519 = vmul.f32 %v508, %v517
  %v522 = vcombine.low %v518, %v519
  %v524 = vadd.f32 %v505, %v522
  %525 = vst [vmem:[%s10] sm:$0xff] %v524
  %v526 = vld [vmem:[%s10] sm:$0xff]
  %527 = vset.pattern.permute.xlu0 4
  %528 = vperm.xlu0 %527, %v37
  %v529 = vpop.permute.xlu0 %528
  %v531 = vlaneseq
  %v532 = vshrl.u32 %v531, 7
  %v533 = vsub.s32 4, %v532
  %v534 = vrot.slane %v430, %v533
  %v535 = vlaneseq
  %v536 = vshrl.u32 %v535, 7
  %v537 = vsub.s32 4, %v536
  %v538 = vrot.slane %v431, %v537
  %v539 = vmul.f32 %v529, %v534
  %v540 = vmul.f32 %v529, %v538
  %v543 = vcombine.low %v539, %v540
  %v545 = vadd.f32 %v526, %v543
  %546 = vst [vmem:[%s10] sm:$0xff] %v545
  %v547 = vld [vmem:[%s10] sm:$0xff]
  %548 = vset.pattern.permute.xlu0 5
  %549 = vperm.xlu0 %548, %v37
  %v550 = vpop.permute.xlu0 %549
  %v552 = vlaneseq
  %v553 = vshrl.u32 %v552, 7
  %v554 = vsub.s32 5, %v553
  %v555 = vrot.slane %v430, %v554
  %v556 = vlaneseq
  %v557 = vshrl.u32 %v556, 7
  %v558 = vsub.s32 5, %v557
  %v559 = vrot.slane %v431, %v558
  %v560 = vmul.f32 %v550, %v555
  %v561 = vmul.f32 %v550, %v559
  %v564 = vcombine.low %v560, %v561
  %v566 = vadd.f32 %v547, %v564
  %567 = vst [vmem:[%s10] sm:$0xff] %v566
  %v568 = vld [vmem:[%s10] sm:$0xff]
  %569 = vset.pattern.permute.xlu0 6
  %570 = vperm.xlu0 %569, %v37
  %v571 = vpop.permute.xlu0 %570
  %v573 = vlaneseq
  %v574 = vshrl.u32 %v573, 7
  %v575 = vsub.s32 6, %v574
  %v576 = vrot.slane %v430, %v575
  %v577 = vlaneseq
  %v578 = vshrl.u32 %v577, 7
  %v579 = vsub.s32 6, %v578
  %v580 = vrot.slane %v431, %v579
  %v581 = vmul.f32 %v571, %v576
  %v582 = vmul.f32 %v571, %v580
  %v585 = vcombine.low %v581, %v582
  %v587 = vadd.f32 %v568, %v585
  %588 = vst [vmem:[%s10] sm:$0xff] %v587
  %v589 = vld [vmem:[%s10] sm:$0xff]
  %590 = vset.pattern.permute.xlu0 7
  %591 = vperm.xlu0 %590, %v37
  %v592 = vpop.permute.xlu0 %591
  %v594 = vlaneseq
  %v595 = vshrl.u32 %v594, 7
  %v596 = vsub.s32 7, %v595
  %v597 = vrot.slane %v430, %v596
  %v598 = vlaneseq
  %v599 = vshrl.u32 %v598, 7
  %v600 = vsub.s32 7, %v599
  %v601 = vrot.slane %v431, %v600
  %v602 = vmul.f32 %v592, %v597
  %v603 = vmul.f32 %v592, %v601
  %v606 = vcombine.low %v602, %v603
  %v608 = vadd.f32 %v589, %v606
  %609 = vst [vmem:[%s10] sm:$0xff] %v608
  %s610 = scalar_lea.vmem %s0, 8
  %v611 = vld [vmem:[%s610] sm:$0xff]
  %v613 = vlaneseq
  %v614 = vshrl.u32 %v613, 7
  %v615 = vsub.s32 0, %v614
  %v616 = vrot.slane %v611, %v615
  %v617 = vlaneseq
  %v618 = vshrl.u32 %v617, 7
  %v619 = vsub.s32 4, %v618
  %v620 = vrot.slane %v611, %v619
  %v623 = vlaneseq
  %v624 = vshrl.u32 %v623, 7
  %v625 = vsub.s32 0, %v624
  %v626 = vrot.slane %v616, %v625
  %v627 = vlaneseq
  %v628 = vshrl.u32 %v627, 7
  %v629 = vsub.s32 0, %v628
  %v630 = vrot.slane %v620, %v629
  %v631 = vmul.f32 %v62, %v626
  %v632 = vmul.f32 %v62, %v630
  %v633 = vlaneseq
  %v634 = vshrl.u32 %v633, 7
  %v635 = vsub.s32 1, %v634
  %v636 = vrot.slane %v611, %v635
  %v637 = vlaneseq
  %v638 = vshrl.u32 %v637, 7
  %v639 = vsub.s32 5, %v638
  %v640 = vrot.slane %v611, %v639
  %v643 = vlaneseq
  %v644 = vshrl.u32 %v643, 7
  %v645 = vsub.s32 1, %v644
  %v646 = vrot.slane %v636, %v645
  %v647 = vlaneseq
  %v648 = vshrl.u32 %v647, 7
  %v649 = vsub.s32 1, %v648
  %v650 = vrot.slane %v640, %v649
  %v651 = vmul.f32 %v87, %v646
  %v652 = vmul.f32 %v87, %v650
  %v653 = vadd.f32 %v631, %v651
  %v654 = vadd.f32 %v632, %v652
  %v655 = vlaneseq
  %v656 = vshrl.u32 %v655, 7
  %v657 = vsub.s32 2, %v656
  %v658 = vrot.slane %v611, %v657
  %v659 = vlaneseq
  %v660 = vshrl.u32 %v659, 7
  %v661 = vsub.s32 6, %v660
  %v662 = vrot.slane %v611, %v661
  %v665 = vlaneseq
  %v666 = vshrl.u32 %v665, 7
  %v667 = vsub.s32 2, %v666
  %v668 = vrot.slane %v658, %v667
  %v669 = vlaneseq
  %v670 = vshrl.u32 %v669, 7
  %v671 = vsub.s32 2, %v670
  %v672 = vrot.slane %v662, %v671
  %v673 = vmul.f32 %v113, %v668
  %v674 = vmul.f32 %v113, %v672
  %v675 = vadd.f32 %v653, %v673
  %v676 = vadd.f32 %v654, %v674
  %v677 = vlaneseq
  %v678 = vshrl.u32 %v677, 7
  %v679 = vsub.s32 3, %v678
  %v680 = vrot.slane %v611, %v679
  %v681 = vlaneseq
  %v682 = vshrl.u32 %v681, 7
  %v683 = vsub.s32 7, %v682
  %v684 = vrot.slane %v611, %v683
  %v687 = vlaneseq
  %v688 = vshrl.u32 %v687, 7
  %v689 = vsub.s32 3, %v688
  %v690 = vrot.slane %v680, %v689
  %v691 = vlaneseq
  %v692 = vshrl.u32 %v691, 7
  %v693 = vsub.s32 3, %v692
  %v694 = vrot.slane %v684, %v693
  %v695 = vmul.f32 %v139, %v690
  %v696 = vmul.f32 %v139, %v694
  %v697 = vadd.f32 %v675, %v695
  %v698 = vadd.f32 %v676, %v696
  %v699 = vadd.f32 %v697, %v166
  %v700 = vadd.f32 %v698, %v166
  %vm701 = vcmp.ge.f32.partialorder %v699, 0.0
  %vm702 = vcmp.ge.f32.partialorder %v700, 0.0
  %v703 = vmul.f32 %v175, %v699
  %v704 = vmul.f32 %v175, %v700
  %v705 = vsel %vm701, %v699, %v703
  %v706 = vsel %vm702, %v700, %v704
  %707 = vrot.lane.b32.xlu0 %v705, 17
  %v708 = vpop.permute.xlu0 %707
  %709 = vrot.lane.b32.xlu0 %v706, 17
  %v710 = vpop.permute.xlu0 %709
  %v711 = vsel %vm187, %v708, %v710
  %v712 = vsel %vm187, %v710, %v708
  %v713 = vmul.f32 %v712, %v194
  %v714 = vmul.f32 %v711, %v198
  %v715 = vmul.f32 %v206, %v713
  %v716 = vmul.f32 %v206, %v714
  %717 = vrot.lane.b32.xlu0 %v705, 16
  %v718 = vpop.permute.xlu0 %717
  %719 = vrot.lane.b32.xlu0 %v706, 16
  %v720 = vpop.permute.xlu0 %719
  %v721 = vsel %vm214, %v718, %v720
  %v722 = vsel %vm214, %v720, %v718
  %v723 = vmul.f32 %v722, %v221
  %v724 = vmul.f32 %v721, %v225
  %v725 = vmul.f32 %v232, %v723
  %v726 = vmul.f32 %v232, %v724
  %v727 = vadd.f32 %v715, %v725
  %v728 = vadd.f32 %v716, %v726
  %729 = vrot.lane.b32.xlu0 %v705, 15
  %v730 = vpop.permute.xlu0 %729
  %731 = vrot.lane.b32.xlu0 %v706, 15
  %v732 = vpop.permute.xlu0 %731
  %v733 = vsel %vm242, %v730, %v732
  %v734 = vsel %vm242, %v732, %v730
  %v735 = vmul.f32 %v734, %v249
  %v736 = vmul.f32 %v733, %v253
  %v737 = vmul.f32 %v260, %v735
  %v738 = vmul.f32 %v260, %v736
  %v739 = vadd.f32 %v727, %v737
  %v740 = vadd.f32 %v728, %v738
  %741 = vrot.lane.b32.xlu0 %v705, 1
  %v742 = vpop.permute.xlu0 %741
  %743 = vrot.lane.b32.xlu0 %v706, 1
  %v744 = vpop.permute.xlu0 %743
  %v745 = vsel %vm270, %v742, %v744
  %v746 = vsel %vm270, %v744, %v742
  %v747 = vmul.f32 %v746, %v277
  %v748 = vmul.f32 %v745, %v281
  %v749 = vmul.f32 %v288, %v747
  %v750 = vmul.f32 %v288, %v748
  %v751 = vadd.f32 %v739, %v749
  %v752 = vadd.f32 %v740, %v750
  %v753 = vmul.f32 %v296, %v705
  %v754 = vmul.f32 %v296, %v706
  %v755 = vadd.f32 %v751, %v753
  %v756 = vadd.f32 %v752, %v754
  %757 = vrot.lane.b32.xlu0 %v705, 127
  %v758 = vpop.permute.xlu0 %757
  %759 = vrot.lane.b32.xlu0 %v706, 127
  %v760 = vpop.permute.xlu0 %759
  %v761 = vsel %vm306, %v758, %v760
  %v762 = vsel %vm306, %v760, %v758
  %v763 = vmul.f32 %v761, %v313
  %v764 = vmul.f32 %v762, %v317
  %v765 = vmul.f32 %v324, %v763
  %v766 = vmul.f32 %v324, %v764
  %v767 = vadd.f32 %v755, %v765
  %v768 = vadd.f32 %v756, %v766
  %769 = vrot.lane.b32.xlu0 %v705, 113
  %v770 = vpop.permute.xlu0 %769
  %771 = vrot.lane.b32.xlu0 %v706, 113
  %v772 = vpop.permute.xlu0 %771
  %v773 = vsel %vm334, %v770, %v772
  %v774 = vsel %vm334, %v772, %v770
  %v775 = vmul.f32 %v773, %v341
  %v776 = vmul.f32 %v774, %v345
  %v777 = vmul.f32 %v352, %v775
  %v778 = vmul.f32 %v352, %v776
  %v779 = vadd.f32 %v767, %v777
  %v780 = vadd.f32 %v768, %v778
  %781 = vrot.lane.b32.xlu0 %v705, 112
  %v782 = vpop.permute.xlu0 %781
  %783 = vrot.lane.b32.xlu0 %v706, 112
  %v784 = vpop.permute.xlu0 %783
  %v785 = vsel %vm362, %v782, %v784
  %v786 = vsel %vm362, %v784, %v782
  %v787 = vmul.f32 %v785, %v369
  %v788 = vmul.f32 %v786, %v373
  %v789 = vmul.f32 %v380, %v787
  %v790 = vmul.f32 %v380, %v788
  %v791 = vadd.f32 %v779, %v789
  %v792 = vadd.f32 %v780, %v790
  %793 = vrot.lane.b32.xlu0 %v705, 111
  %v794 = vpop.permute.xlu0 %793
  %795 = vrot.lane.b32.xlu0 %v706, 111
  %v796 = vpop.permute.xlu0 %795
  %v797 = vsel %vm390, %v794, %v796
  %v798 = vsel %vm390, %v796, %v794
  %v799 = vmul.f32 %v797, %v397
  %v800 = vmul.f32 %v798, %v401
  %v801 = vmul.f32 %v408, %v799
  %v802 = vmul.f32 %v408, %v800
  %v803 = vadd.f32 %v791, %v801
  %v804 = vadd.f32 %v792, %v802
  %v805 = vadd.f32 %v803, %v417
  %v806 = vadd.f32 %v804, %v417
  %vm807 = vcmp.ge.f32.partialorder %v805, 0.0
  %vm808 = vcmp.ge.f32.partialorder %v806, 0.0
  %v809 = vmul.f32 %v426, %v805
  %v810 = vmul.f32 %v426, %v806
  %v811 = vsel %vm807, %v805, %v809
  %v812 = vsel %vm808, %v806, %v810
  %v813 = vlaneseq
  %v814 = vshrl.u32 %v813, 7
  %v815 = vsub.s32 0, %v814
  %v816 = vrot.slane %v811, %v815
  %v817 = vlaneseq
  %v818 = vshrl.u32 %v817, 7
  %v819 = vsub.s32 0, %v818
  %v820 = vrot.slane %v812, %v819
  %v821 = vmul.f32 %v435, %v816
  %v822 = vmul.f32 %v435, %v820
  %v823 = vadd.f32 %v821, %v450
  %v824 = vadd.f32 %v822, %v450
  %v825 = vcombine.high %v611, %v611
  %v827 = vadd.f32 %v823, %v611
  %v828 = vadd.f32 %v824, %v825
  %v831 = vcombine.low %v827, %v828
  %s833 = scalar_lea.vmem %s10, 8
  %834 = vst [vmem:[%s833] sm:$0xff] %v831
  %v835 = vld [vmem:[%s833] sm:$0xff]
  %v836 = vlaneseq
  %v837 = vshrl.u32 %v836, 7
  %v838 = vsub.s32 1, %v837
  %v839 = vrot.slane %v811, %v838
  %v840 = vlaneseq
  %v841 = vshrl.u32 %v840, 7
  %v842 = vsub.s32 1, %v841
  %v843 = vrot.slane %v812, %v842
  %v844 = vmul.f32 %v466, %v839
  %v845 = vmul.f32 %v466, %v843
  %v848 = vcombine.low %v844, %v845
  %v850 = vadd.f32 %v835, %v848
  %851 = vst [vmem:[%s833] sm:$0xff] %v850
  %v852 = vld [vmem:[%s833] sm:$0xff]
  %v853 = vlaneseq
  %v854 = vshrl.u32 %v853, 7
  %v855 = vsub.s32 2, %v854
  %v856 = vrot.slane %v811, %v855
  %v857 = vlaneseq
  %v858 = vshrl.u32 %v857, 7
  %v859 = vsub.s32 2, %v858
  %v860 = vrot.slane %v812, %v859
  %v861 = vmul.f32 %v487, %v856
  %v862 = vmul.f32 %v487, %v860
  %v865 = vcombine.low %v861, %v862
  %v867 = vadd.f32 %v852, %v865
  %868 = vst [vmem:[%s833] sm:$0xff] %v867
  %v869 = vld [vmem:[%s833] sm:$0xff]
  %v870 = vlaneseq
  %v871 = vshrl.u32 %v870, 7
  %v872 = vsub.s32 3, %v871
  %v873 = vrot.slane %v811, %v872
  %v874 = vlaneseq
  %v875 = vshrl.u32 %v874, 7
  %v876 = vsub.s32 3, %v875
  %v877 = vrot.slane %v812, %v876
  %v878 = vmul.f32 %v508, %v873
  %v879 = vmul.f32 %v508, %v877
  %v882 = vcombine.low %v878, %v879
  %v884 = vadd.f32 %v869, %v882
  %885 = vst [vmem:[%s833] sm:$0xff] %v884
  %v886 = vld [vmem:[%s833] sm:$0xff]
  %v887 = vlaneseq
  %v888 = vshrl.u32 %v887, 7
  %v889 = vsub.s32 4, %v888
  %v890 = vrot.slane %v811, %v889
  %v891 = vlaneseq
  %v892 = vshrl.u32 %v891, 7
  %v893 = vsub.s32 4, %v892
  %v894 = vrot.slane %v812, %v893
  %v895 = vmul.f32 %v529, %v890
  %v896 = vmul.f32 %v529, %v894
  %v899 = vcombine.low %v895, %v896
  %v901 = vadd.f32 %v886, %v899
  %902 = vst [vmem:[%s833] sm:$0xff] %v901
  %v903 = vld [vmem:[%s833] sm:$0xff]
  %v904 = vlaneseq
  %v905 = vshrl.u32 %v904, 7
  %v906 = vsub.s32 5, %v905
  %v907 = vrot.slane %v811, %v906
  %v908 = vlaneseq
  %v909 = vshrl.u32 %v908, 7
  %v910 = vsub.s32 5, %v909
  %v911 = vrot.slane %v812, %v910
  %v912 = vmul.f32 %v550, %v907
  %v913 = vmul.f32 %v550, %v911
  %v916 = vcombine.low %v912, %v913
  %v918 = vadd.f32 %v903, %v916
  %919 = vst [vmem:[%s833] sm:$0xff] %v918
  %v920 = vld [vmem:[%s833] sm:$0xff]
  %v921 = vlaneseq
  %v922 = vshrl.u32 %v921, 7
  %v923 = vsub.s32 6, %v922
  %v924 = vrot.slane %v811, %v923
  %v925 = vlaneseq
  %v926 = vshrl.u32 %v925, 7
  %v927 = vsub.s32 6, %v926
  %v928 = vrot.slane %v812, %v927
  %v929 = vmul.f32 %v571, %v924
  %v930 = vmul.f32 %v571, %v928
  %v933 = vcombine.low %v929, %v930
  %v935 = vadd.f32 %v920, %v933
  %936 = vst [vmem:[%s833] sm:$0xff] %v935
  %v937 = vld [vmem:[%s833] sm:$0xff]
  %v938 = vlaneseq
  %v939 = vshrl.u32 %v938, 7
  %v940 = vsub.s32 7, %v939
  %v941 = vrot.slane %v811, %v940
  %v942 = vlaneseq
  %v943 = vshrl.u32 %v942, 7
  %v944 = vsub.s32 7, %v943
  %v945 = vrot.slane %v812, %v944
  %v946 = vmul.f32 %v592, %v941
  %v947 = vmul.f32 %v592, %v945
  %v950 = vcombine.low %v946, %v947
  %v952 = vadd.f32 %v937, %v950
  %953 = vst [vmem:[%s833] sm:$0xff] %v952
  // Predicated region
  $region42: #{bottleneck_forward.1} parent=0 // pred_check
    _
  $region43: #{bottleneck_forward.1} parent=0 // pred_check_branch
    %955 = sbr.rel (0) target = $region45
  $region44: #{bottleneck_forward.1} parent=0 // pred_region
    _
  $region45: #{bottleneck_forward.1} parent=0 // pred_fallthru
    _
  // Predicated region
  $region46: #{bottleneck_forward.1} parent=0 // pred_check
    _
  $region47: #{bottleneck_forward.1} parent=0 // pred_check_branch
    %957 = sbr.rel (0) target = $region49
  $region48: #{bottleneck_forward.1} parent=0 // pred_region
    _
  $region49: #{bottleneck_forward.1} parent=0 // pred_fallthru
    _

</llo_original>
